<compile_context>
chip_gen: v7x
topology: tpu7x:2x2x1
jax: 0.10.0
libtpu: 0.0.40
codegen_flags: <defaults>
</compile_context>

<pallas_src>
import jax
import jax.numpy as jnp
from jax import lax
from jax.experimental import pallas as pl
from jax.experimental.pallas import tpu as pltpu


def _gcn_mlp_kernel(x_ref, adjr_ref, adjc_ref,
                    w1a_ref, w1b_ref, b1a_ref, b1b_ref,
                    wga_ref, wgb_ref, bga_ref, bgb_ref,
                    w2a_ref, w2b_ref, b2_ref,
                    out_ref, g1_scr, g2_scr):
    r = pl.program_id(1)            # row-tile index along N (innermost, sequential)
    tn = out_ref.shape[0]           # rows per tile
    cdt = g1_scr.dtype              # bf16 MXU dtype

    # gcn(x) + bg computed ONCE per batch element (first row tile), written
    # directly into the two half-width scratches (no (N, 2H) temporary, no
    # lane-slice copies).  Requires the r axis to stay sequential ("arbitrary").
    @pl.when(r == 0)
    def _():
        xb = x_ref[...]                                          # (N, D) bf16
        g1_scr[...] = (jnp.dot(xb, wga_ref[...],
                               preferred_element_type=jnp.float32)
                       + bga_ref[...]).astype(cdt)
        g2_scr[...] = (jnp.dot(xb, wgb_ref[...],
                               preferred_element_type=jnp.float32)
                       + bgb_ref[...]).astype(cdt)

    # Graph aggregation for this row slab.  adj is streamed from HBM in its
    # original dtype; the cast to bf16 hides under MXU slack.
    adj_rows = adjr_ref[...].astype(cdt)                         # (tn, N)
    adj_cols = adjc_ref[...].astype(cdt)                         # (N, tn)

    #   a1[i, f] = sum_k adj[row_i, k]  * g1[k, f]
    a1 = jnp.dot(adj_rows, g1_scr[...], preferred_element_type=jnp.float32)
    #   a2[i, f] = sum_k adj[k, row_i]  * g2[k, f]   (adj^T rows via column slab,
    #   transposed-LHS contraction on the MXU — no wrapper transpose needed)
    a2 = lax.dot_general(adj_cols, g2_scr[...],
                         dimension_numbers=(((0,), (0,)), ((), ())),
                         preferred_element_type=jnp.float32)

    # fc1 recomputed for this row slab from the already-resident x (same total
    # flops as caching; removes the (N, H) f32 scratch of the old version).
    row0 = pl.multiple_of(r * tn, tn)
    x_rows = x_ref[pl.ds(row0, tn), :]                           # (tn, D) bf16

    x1a = jnp.dot(x_rows, w1a_ref[...],
                  preferred_element_type=jnp.float32) + b1a_ref[...]
    x1b = jnp.dot(x_rows, w1b_ref[...],
                  preferred_element_type=jnp.float32) + b1b_ref[...]

    h1 = jnp.maximum(x1a + a1, 0.0).astype(w2a_ref.dtype)        # ReLU in f32
    h2 = jnp.maximum(x1b + a2, 0.0).astype(w2b_ref.dtype)

    # fc2 on the (implicitly concatenated) hidden: W2 split by rows, bf16 MXU.
    out = (jnp.dot(h1, w2a_ref[...], preferred_element_type=jnp.float32)
           + jnp.dot(h2, w2b_ref[...], preferred_element_type=jnp.float32)
           + b2_ref[...])
    out_ref[...] = out.astype(out_ref.dtype)


def _vmem_budget_bytes():
    """Generation-aware VMEM limit with headroom for Mosaic's own scratch."""
    cap = 128 * 1024 * 1024
    try:
        cap = int(pltpu.get_tpu_info().vmem_capacity_bytes)
    except Exception:
        pass
    # 3/4 of physical, and never closer than 16 MiB to the physical capacity.
    return min(cap - 16 * 1024 * 1024, (3 * cap) // 4)


def _choose_tn(n_pad, block_n, est_fn, budget):
    """Largest multiple of 128 <= block_n that divides n_pad and fits budget."""
    best = 128
    t = 128
    upper = min(block_n, n_pad)
    while t <= upper:
        if n_pad % t == 0 and est_fn(t) <= budget:
            best = t
        t += 128
    return best


def gcn_mlp_pallas(x, adj, params, *, block_n=256):
    """x: (B, N, D), adj: (B, N, N). Returns (B, N, D_out)."""
    B, N, D = x.shape
    w1, b1 = params["fc1_w"], params["fc1_b"]     # (H, D), (H,)
    wg, bg = params["gcn_w"], params["gcn_b"]     # (H, D), (H,)
    w2, b2 = params["fc2_w"], params["fc2_b"]     # (Do, H), (Do,)
    H = w1.shape[0]
    half = H // 2
    Do = w2.shape[0]
    out_dtype = x.dtype

    cdt = jnp.bfloat16   # dtype fed to the MXU

    # Pad the node dimension to a lane-aligned multiple of 128.  Zero padding
    # is exact: padded adj rows/cols are zero, so padded g rows (== bias) never
    # contribute, and padded output rows are sliced away below.
    N_pad = max(128, ((N + 127) // 128) * 128)
    if N_pad != N:
        x = jnp.pad(x, ((0, 0), (0, N_pad - N), (0, 0)))
        adj = jnp.pad(adj, ((0, 0), (0, N_pad - N), (0, N_pad - N)))

    adj_isz = jnp.dtype(adj.dtype).itemsize
    budget = _vmem_budget_bytes()

    def est(tn):
        return (2 * 2 * tn * N_pad * adj_isz          # adj row + col slabs, 2x buffered
                + 2 * N_pad * D * 2                   # x slab (bf16), 2x buffered
                + 2 * N_pad * half * 2                # g1/g2 bf16 scratch
                + 2 * tn * Do * 4                     # output tile, 2x buffered
                + 2 * (2 * D * H + H * Do) * 2        # weights (bf16), 2x buffered
                + (2 << 20))                          # slack for in-kernel temporaries

    tn = _choose_tn(N_pad, block_n, est, budget)
    n_row_tiles = N_pad // tn

    # Pre-split weights/biases per half so the kernel never slices lanes.
    w1t = w1.T.astype(cdt)                 # (D, H)
    wgt = wg.T.astype(cdt)                 # (D, H)
    w2t = w2.T.astype(cdt)                 # (H, Do)
    w1a, w1b = w1t[:, :half], w1t[:, half:]
    wga, wgb = wgt[:, :half], wgt[:, half:]
    w2a, w2b = w2t[:half, :], w2t[half:, :]
    b1a = b1[:half].reshape(1, half).astype(jnp.float32)
    b1b = b1[half:].reshape(1, half).astype(jnp.float32)
    bga = bg[:half].reshape(1, half).astype(jnp.float32)
    bgb = bg[half:].reshape(1, half).astype(jnp.float32)
    b2r = b2.reshape(1, Do).astype(jnp.float32)

    x_c = x.astype(cdt)
    # adj is intentionally NOT cast / transposed here: f32 streamed directly is
    # fewer HBM bytes than a pre-cast pass + bf16 re-read, and adj^T is never
    # materialized (the kernel reads a column slab instead).

    def const(a):
        return pl.BlockSpec(a.shape, lambda b, r: (0,) * a.ndim)

    out = pl.pallas_call(
        _gcn_mlp_kernel,
        out_shape=jax.ShapeDtypeStruct((B, N_pad, Do), out_dtype),
        grid=(B, n_row_tiles),
        in_specs=[
            # Full x rows for this batch element (block index only depends on b).
            pl.BlockSpec((None, N_pad, D), lambda b, r: (b, 0, 0)),
            # adj row slab (for adj @ g1) and adj column slab (for adj^T @ g2).
            pl.BlockSpec((None, tn, N_pad), lambda b, r: (b, r, 0)),
            pl.BlockSpec((None, N_pad, tn), lambda b, r: (b, 0, r)),
            const(w1a), const(w1b), const(b1a), const(b1b),
            const(wga), const(wgb), const(bga), const(bgb),
            const(w2a), const(w2b), const(b2r),
        ],
        out_specs=pl.BlockSpec((None, tn, Do), lambda b, r: (b, r, 0)),
        scratch_shapes=[
            pltpu.VMEM((N_pad, half), cdt),    # cached g1 = gcn(x)[:, :half] + bg1
            pltpu.VMEM((N_pad, half), cdt),    # cached g2 = gcn(x)[:, half:] + bg2
        ],
        compiler_params=pltpu.CompilerParams(
            # r must stay "arbitrary": the g scratches are filled at r == 0 and
            # reused by later row tiles of the same batch element.
            dimension_semantics=("parallel", "arbitrary"),
            vmem_limit_bytes=int(budget)),
    )(x_c, adj, adj, w1a, w1b, b1a, b1b, wga, wgb, bga, bgb, w2a, w2b, b2r)

    if N_pad != N:
        out = out[:, :N, :]
    return out


def gcn_mlp_reference(x, adj, params):
    """Pure-JAX f32 reference mirroring the PyTorch forward."""
    w1, b1 = params["fc1_w"], params["fc1_b"]
    wg, bg = params["gcn_w"], params["gcn_b"]
    w2, b2 = params["fc2_w"], params["fc2_b"]
    H = w1.shape[0]
    half = H // 2
    x1 = x @ w1.T + b1
    g = x @ wg.T + bg
    g1, g2 = g[..., :half], g[..., half:]
    adj_t = jnp.swapaxes(adj, -1, -2)
    h = x1 + jnp.concatenate([adj @ g1, adj_t @ g2], axis=-1)
    h = jnp.maximum(h, 0.0)
    return h @ w2.T + b2


def init_params(key, dim, mlp_ratio=4.0, out_features=None):
    out_features = out_features or dim
    hidden = int(mlp_ratio * dim)
    ks = jax.random.split(key, 6)
    scale_in = 1.0 / jnp.sqrt(dim)
    scale_h = 1.0 / jnp.sqrt(hidden)
    return {
        "fc1_w": jax.random.uniform(ks[0], (hidden, dim), jnp.float32,
                                    -scale_in, scale_in),
        "fc1_b": jax.random.uniform(ks[1], (hidden,), jnp.float32,
                                    -scale_in, scale_in),
        "gcn_w": jax.random.uniform(ks[2], (hidden, dim), jnp.float32,
                                    -scale_in, scale_in),
        "gcn_b": jax.random.uniform(ks[3], (hidden,), jnp.float32,
                                    -scale_in, scale_in),
        "fc2_w": jax.random.uniform(ks[4], (out_features, hidden), jnp.float32,
                                    -scale_h, scale_h),
        "fc2_b": jax.random.uniform(ks[5], (out_features,), jnp.float32,
                                    -scale_h, scale_h),
    }


if __name__ == "__main__":
    # Small config: D=128 -> hidden=512, half=256; N=16 gets zero-padded to 128
    # inside the wrapper so all slabs stay lane-dense.
    B, N, D = 2, 16, 128
    key = jax.random.PRNGKey(0)
    kx, kadj, kp = jax.random.split(key, 3)

    x = jax.random.normal(kx, (B, N, D), jnp.float32)
    adj = jax.random.uniform(kadj, (B, N, N), jnp.float32)
    params = init_params(kp, D, mlp_ratio=4.0)

    out = gcn_mlp_pallas(x, adj, params)
    out = jax.block_until_ready(out)

    ref = gcn_mlp_reference(x, adj, params)
    assert out.shape == ref.shape, (out.shape, ref.shape)
    # bf16 MXU operands -> loosened tolerance vs the f32 reference.
    assert jnp.allclose(out, ref, atol=5e-2, rtol=5e-2), (
        "mismatch vs reference, max abs diff = "
        f"{float(jnp.max(jnp.abs(out - ref)))}")

    print("KERNEL_OK")
</pallas_src>

<mosaic_0001>
module attributes {stable_mosaic.version = 11 : i64} {
  func.func @_gcn_mlp_kernel(%arg0: i32, %arg1: i32, %arg2: memref<1x128x128xbf16, #tpu.memory_space<vmem>>, %arg3: memref<1x128x128xf32, #tpu.memory_space<vmem>>, %arg4: memref<1x128x128xf32, #tpu.memory_space<vmem>>, %arg5: memref<128x256xbf16, #tpu.memory_space<vmem>>, %arg6: memref<128x256xbf16, #tpu.memory_space<vmem>>, %arg7: memref<1x256xf32, #tpu.memory_space<vmem>>, %arg8: memref<1x256xf32, #tpu.memory_space<vmem>>, %arg9: memref<128x256xbf16, #tpu.memory_space<vmem>>, %arg10: memref<128x256xbf16, #tpu.memory_space<vmem>>, %arg11: memref<1x256xf32, #tpu.memory_space<vmem>>, %arg12: memref<1x256xf32, #tpu.memory_space<vmem>>, %arg13: memref<256x128xbf16, #tpu.memory_space<vmem>>, %arg14: memref<256x128xbf16, #tpu.memory_space<vmem>>, %arg15: memref<1x128xf32, #tpu.memory_space<vmem>>, %arg16: memref<1x128x128xf32, #tpu.memory_space<vmem>>, %arg17: memref<128x256xbf16, #tpu.memory_space<vmem>>, %arg18: memref<128x256xbf16, #tpu.memory_space<vmem>>) attributes {dimension_semantics = [#tpu.dimension_semantics<parallel>, #tpu.dimension_semantics<arbitrary>], iteration_bounds = array<i64: 2, 1>, scalar_prefetch = 0 : i64, scratch_operands = 2 : i64, tpu.core_type = #tpu.core_type<tc>, window_params = [{transform_indices = @transform_0, window_bounds = array<i64: 1, 128, 128>}, {transform_indices = @transform_1, window_bounds = array<i64: 1, 128, 128>}, {transform_indices = @transform_2, window_bounds = array<i64: 1, 128, 128>}, {pipeline_mode = #tpu.pipeline_mode<synchronous>, transform_indices = @transform_3, window_bounds = array<i64: 128, 256>}, {pipeline_mode = #tpu.pipeline_mode<synchronous>, transform_indices = @transform_4, window_bounds = array<i64: 128, 256>}, {pipeline_mode = #tpu.pipeline_mode<synchronous>, transform_indices = @transform_5, window_bounds = array<i64: 1, 256>}, {pipeline_mode = #tpu.pipeline_mode<synchronous>, transform_indices = @transform_6, window_bounds = array<i64: 1, 256>}, {pipeline_mode = #tpu.pipeline_mode<synchronous>, transform_indices = @transform_7, window_bounds = array<i64: 128, 256>}, {pipeline_mode = #tpu.pipeline_mode<synchronous>, transform_indices = @transform_8, window_bounds = array<i64: 128, 256>}, {pipeline_mode = #tpu.pipeline_mode<synchronous>, transform_indices = @transform_9, window_bounds = array<i64: 1, 256>}, {pipeline_mode = #tpu.pipeline_mode<synchronous>, transform_indices = @transform_10, window_bounds = array<i64: 1, 256>}, {pipeline_mode = #tpu.pipeline_mode<synchronous>, transform_indices = @transform_11, window_bounds = array<i64: 256, 128>}, {pipeline_mode = #tpu.pipeline_mode<synchronous>, transform_indices = @transform_12, window_bounds = array<i64: 256, 128>}, {pipeline_mode = #tpu.pipeline_mode<synchronous>, transform_indices = @transform_13, window_bounds = array<i64: 1, 128>}, {transform_indices = @transform_14, window_bounds = array<i64: 1, 128, 128>}]} {
    %c0_i32 = arith.constant 0 : i32
    %0 = arith.cmpi eq, %arg1, %c0_i32 : i32
    %1 = arith.extui %0 : i1 to i32
    %c0_i32_0 = arith.constant 0 : i32
    %2 = arith.cmpi ne, %1, %c0_i32_0 : i32
    scf.if %2 {
      %c0_36 = arith.constant 0 : index
      %c0_37 = arith.constant 0 : index
      %c0_38 = arith.constant 0 : index
      %47 = vector.load %arg2[%c0_36, %c0_37, %c0_38] : memref<1x128x128xbf16, #tpu.memory_space<vmem>>, vector<1x128x128xbf16>
      %48 = vector.shape_cast %47 : vector<1x128x128xbf16> to vector<128x128xbf16>
      %c0_39 = arith.constant 0 : index
      %c0_40 = arith.constant 0 : index
      %49 = vector.load %arg9[%c0_39, %c0_40] : memref<128x256xbf16, #tpu.memory_space<vmem>>, vector<128x256xbf16>
      %cst_41 = arith.constant dense<0.000000e+00> : vector<128x256xf32>
      %50 = tpu.matmul %48, %49, %cst_41 {dimension_numbers = #tpu.dot_dimension_numbers<[1], [0], [0], [1], [0, 0, 1, 1], [], []>} : vector<128x128xbf16>, vector<128x256xbf16>, vector<128x256xf32> -> vector<128x256xf32>
      %c0_42 = arith.constant 0 : index
      %c0_43 = arith.constant 0 : index
      %51 = vector.load %arg11[%c0_42, %c0_43] : memref<1x256xf32, #tpu.memory_space<vmem>>, vector<1x256xf32>
      %52 = vector.broadcast %51 : vector<1x256xf32> to vector<128x256xf32>
      %53 = arith.addf %50, %52 : vector<128x256xf32>
      %54 = arith.truncf %53 : vector<128x256xf32> to vector<128x256xbf16>
      %c0_44 = arith.constant 0 : index
      %c0_45 = arith.constant 0 : index
      %55 = vector.load %arg17[%c0_44, %c0_45] : memref<128x256xbf16, #tpu.memory_space<vmem>>, vector<128x256xbf16>
      tpu.vector_store %arg17[%c0_44, %c0_45], %54 {strides = array<i32>} : memref<128x256xbf16, #tpu.memory_space<vmem>>, vector<128x256xbf16>,
      %c0_46 = arith.constant 0 : index
      %c0_47 = arith.constant 0 : index
      %56 = vector.load %arg10[%c0_46, %c0_47] : memref<128x256xbf16, #tpu.memory_space<vmem>>, vector<128x256xbf16>
      %cst_48 = arith.constant dense<0.000000e+00> : vector<128x256xf32>
      %57 = tpu.matmul %48, %56, %cst_48 {dimension_numbers = #tpu.dot_dimension_numbers<[1], [0], [0], [1], [0, 0, 1, 1], [], []>} : vector<128x128xbf16>, vector<128x256xbf16>, vector<128x256xf32> -> vector<128x256xf32>
      %c0_49 = arith.constant 0 : index
      %c0_50 = arith.constant 0 : index
      %58 = vector.load %arg12[%c0_49, %c0_50] : memref<1x256xf32, #tpu.memory_space<vmem>>, vector<1x256xf32>
      %59 = vector.broadcast %58 : vector<1x256xf32> to vector<128x256xf32>
      %60 = arith.addf %57, %59 : vector<128x256xf32>
      %61 = arith.truncf %60 : vector<128x256xf32> to vector<128x256xbf16>
      %c0_51 = arith.constant 0 : index
      %c0_52 = arith.constant 0 : index
      %62 = vector.load %arg18[%c0_51, %c0_52] : memref<128x256xbf16, #tpu.memory_space<vmem>>, vector<128x256xbf16>
      tpu.vector_store %arg18[%c0_51, %c0_52], %61 {strides = array<i32>} : memref<128x256xbf16, #tpu.memory_space<vmem>>, vector<128x256xbf16>,
    } else {
    }
    %c0 = arith.constant 0 : index
    %c0_1 = arith.constant 0 : index
    %c0_2 = arith.constant 0 : index
    %3 = vector.load %arg3[%c0, %c0_1, %c0_2] : memref<1x128x128xf32, #tpu.memory_space<vmem>>, vector<1x128x128xf32>
    %4 = vector.shape_cast %3 : vector<1x128x128xf32> to vector<128x128xf32>
    %5 = arith.truncf %4 : vector<128x128xf32> to vector<128x128xbf16>
    %c0_3 = arith.constant 0 : index
    %c0_4 = arith.constant 0 : index
    %c0_5 = arith.constant 0 : index
    %6 = vector.load %arg4[%c0_3, %c0_4, %c0_5] : memref<1x128x128xf32, #tpu.memory_space<vmem>>, vector<1x128x128xf32>
    %7 = vector.shape_cast %6 : vector<1x128x128xf32> to vector<128x128xf32>
    %8 = arith.truncf %7 : vector<128x128xf32> to vector<128x128xbf16>
    %c0_6 = arith.constant 0 : index
    %c0_7 = arith.constant 0 : index
    %9 = vector.load %arg17[%c0_6, %c0_7] : memref<128x256xbf16, #tpu.memory_space<vmem>>, vector<128x256xbf16>
    %cst = arith.constant dense<0.000000e+00> : vector<128x256xf32>
    %10 = tpu.matmul %5, %9, %cst {dimension_numbers = #tpu.dot_dimension_numbers<[1], [0], [0], [1], [0, 0, 1, 1], [], []>} : vector<128x128xbf16>, vector<128x256xbf16>, vector<128x256xf32> -> vector<128x256xf32>
    %c0_8 = arith.constant 0 : index
    %c0_9 = arith.constant 0 : index
    %11 = vector.load %arg18[%c0_8, %c0_9] : memref<128x256xbf16, #tpu.memory_space<vmem>>, vector<128x256xbf16>
    %cst_10 = arith.constant dense<0.000000e+00> : vector<128x256xf32>
    %12 = tpu.matmul %8, %11, %cst_10 {dimension_numbers = #tpu.dot_dimension_numbers<[0], [0], [1], [1], [0, 1, 1, 1], [], []>} : vector<128x128xbf16>, vector<128x256xbf16>, vector<128x256xf32> -> vector<128x256xf32>
    %c128_i32 = arith.constant 128 : i32
    %13 = arith.muli %arg1, %c128_i32 : i32
    %14 = tpu.assume_multiple %13, 128 : i32
    %c0_11 = arith.constant 0 : index
    %15 = arith.index_cast %14 : i32 to index
    %c0_12 = arith.constant 0 : index
    %16 = vector.load %arg2[%c0_11, %15, %c0_12] : memref<1x128x128xbf16, #tpu.memory_space<vmem>>, vector<1x128x128xbf16>
    %17 = vector.shape_cast %16 : vector<1x128x128xbf16> to vector<128x128xbf16>
    %c0_13 = arith.constant 0 : index
    %c0_14 = arith.constant 0 : index
    %18 = vector.load %arg5[%c0_13, %c0_14] : memref<128x256xbf16, #tpu.memory_space<vmem>>, vector<128x256xbf16>
    %cst_15 = arith.constant dense<0.000000e+00> : vector<128x256xf32>
    %19 = tpu.matmul %17, %18, %cst_15 {dimension_numbers = #tpu.dot_dimension_numbers<[1], [0], [0], [1], [0, 0, 1, 1], [], []>} : vector<128x128xbf16>, vector<128x256xbf16>, vector<128x256xf32> -> vector<128x256xf32>
    %c0_16 = arith.constant 0 : index
    %c0_17 = arith.constant 0 : index
    %20 = vector.load %arg7[%c0_16, %c0_17] : memref<1x256xf32, #tpu.memory_space<vmem>>, vector<1x256xf32>
    %21 = vector.broadcast %20 : vector<1x256xf32> to vector<128x256xf32>
    %22 = arith.addf %19, %21 : vector<128x256xf32>
    %c0_18 = arith.constant 0 : index
    %c0_19 = arith.constant 0 : index
    %23 = vector.load %arg6[%c0_18, %c0_19] : memref<128x256xbf16, #tpu.memory_space<vmem>>, vector<128x256xbf16>
    %cst_20 = arith.constant dense<0.000000e+00> : vector<128x256xf32>
    %24 = tpu.matmul %17, %23, %cst_20 {dimension_numbers = #tpu.dot_dimension_numbers<[1], [0], [0], [1], [0, 0, 1, 1], [], []>} : vector<128x128xbf16>, vector<128x256xbf16>, vector<128x256xf32> -> vector<128x256xf32>
    %c0_21 = arith.constant 0 : index
    %c0_22 = arith.constant 0 : index
    %25 = vector.load %arg8[%c0_21, %c0_22] : memref<1x256xf32, #tpu.memory_space<vmem>>, vector<1x256xf32>
    %26 = vector.broadcast %25 : vector<1x256xf32> to vector<128x256xf32>
    %27 = arith.addf %24, %26 : vector<128x256xf32>
    %28 = arith.addf %22, %10 : vector<128x256xf32>
    %cst_23 = arith.constant 0.000000e+00 : f32
    %29 = vector.broadcast %cst_23 : f32 to vector<128x256xf32>
    %30 = arith.maximumf %28, %29 : vector<128x256xf32>
    %31 = arith.truncf %30 : vector<128x256xf32> to vector<128x256xbf16>
    %32 = arith.addf %27, %12 : vector<128x256xf32>
    %cst_24 = arith.constant 0.000000e+00 : f32
    %33 = vector.broadcast %cst_24 : f32 to vector<128x256xf32>
    %34 = arith.maximumf %32, %33 : vector<128x256xf32>
    %35 = arith.truncf %34 : vector<128x256xf32> to vector<128x256xbf16>
    %c0_25 = arith.constant 0 : index
    %c0_26 = arith.constant 0 : index
    %36 = vector.load %arg13[%c0_25, %c0_26] : memref<256x128xbf16, #tpu.memory_space<vmem>>, vector<256x128xbf16>
    %cst_27 = arith.constant dense<0.000000e+00> : vector<128x128xf32>
    %37 = tpu.matmul %31, %36, %cst_27 {dimension_numbers = #tpu.dot_dimension_numbers<[1], [0], [0], [1], [0, 0, 1, 1], [], []>} : vector<128x256xbf16>, vector<256x128xbf16>, vector<128x128xf32> -> vector<128x128xf32>
    %c0_28 = arith.constant 0 : index
    %c0_29 = arith.constant 0 : index
    %38 = vector.load %arg14[%c0_28, %c0_29] : memref<256x128xbf16, #tpu.memory_space<vmem>>, vector<256x128xbf16>
    %cst_30 = arith.constant dense<0.000000e+00> : vector<128x128xf32>
    %39 = tpu.matmul %35, %38, %cst_30 {dimension_numbers = #tpu.dot_dimension_numbers<[1], [0], [0], [1], [0, 0, 1, 1], [], []>} : vector<128x256xbf16>, vector<256x128xbf16>, vector<128x128xf32> -> vector<128x128xf32>
    %40 = arith.addf %37, %39 : vector<128x128xf32>
    %c0_31 = arith.constant 0 : index
    %c0_32 = arith.constant 0 : index
    %41 = vector.load %arg15[%c0_31, %c0_32] : memref<1x128xf32, #tpu.memory_space<vmem>>, vector<1x128xf32>
    %42 = vector.broadcast %41 : vector<1x128xf32> to vector<128x128xf32>
    %43 = arith.addf %40, %42 : vector<128x128xf32>
    %c0_33 = arith.constant 0 : index
    %c0_34 = arith.constant 0 : index
    %c0_35 = arith.constant 0 : index
    %44 = vector.load %arg16[%c0_33, %c0_34, %c0_35] : memref<1x128x128xf32, #tpu.memory_space<vmem>>, vector<1x128x128xf32>
    %45 = vector.shape_cast %44 : vector<1x128x128xf32> to vector<128x128xf32>
    %46 = vector.shape_cast %43 : vector<128x128xf32> to vector<1x128x128xf32>
    tpu.vector_store %arg16[%c0_33, %c0_34, %c0_35], %46 {strides = array<i32>} : memref<1x128x128xf32, #tpu.memory_space<vmem>>, vector<1x128x128xf32>,
    return
  }
  func.func @transform_0(%arg0: i32, %arg1: i32) -> (i32, i32, i32) {
    %c0_i32 = arith.constant 0 : i32
    %c0_i32_0 = arith.constant 0 : i32
    %c0_i32_1 = arith.constant 0 : i32
    return %arg0, %c0_i32, %c0_i32_0 : i32, i32, i32
  }
  func.func @transform_1(%arg0: i32, %arg1: i32) -> (i32, i32, i32) {
    %c0_i32 = arith.constant 0 : i32
    %c0_i32_0 = arith.constant 0 : i32
    return %arg0, %arg1, %c0_i32 : i32, i32, i32
  }
  func.func @transform_2(%arg0: i32, %arg1: i32) -> (i32, i32, i32) {
    %c0_i32 = arith.constant 0 : i32
    %c0_i32_0 = arith.constant 0 : i32
    return %arg0, %c0_i32, %arg1 : i32, i32, i32
  }
  func.func @transform_3(%arg0: i32, %arg1: i32) -> (i32, i32) {
    %c0_i32 = arith.constant 0 : i32
    %c0_i32_0 = arith.constant 0 : i32
    %c0_i32_1 = arith.constant 0 : i32
    return %c0_i32, %c0_i32_0 : i32, i32
  }
  func.func @transform_4(%arg0: i32, %arg1: i32) -> (i32, i32) {
    %c0_i32 = arith.constant 0 : i32
    %c0_i32_0 = arith.constant 0 : i32
    %c0_i32_1 = arith.constant 0 : i32
    return %c0_i32, %c0_i32_0 : i32, i32
  }
  func.func @transform_5(%arg0: i32, %arg1: i32) -> (i32, i32) {
    %c0_i32 = arith.constant 0 : i32
    %c0_i32_0 = arith.constant 0 : i32
    %c0_i32_1 = arith.constant 0 : i32
    return %c0_i32, %c0_i32_0 : i32, i32
  }
  func.func @transform_6(%arg0: i32, %arg1: i32) -> (i32, i32) {
    %c0_i32 = arith.constant 0 : i32
    %c0_i32_0 = arith.constant 0 : i32
    %c0_i32_1 = arith.constant 0 : i32
    return %c0_i32, %c0_i32_0 : i32, i32
  }
  func.func @transform_7(%arg0: i32, %arg1: i32) -> (i32, i32) {
    %c0_i32 = arith.constant 0 : i32
    %c0_i32_0 = arith.constant 0 : i32
    %c0_i32_1 = arith.constant 0 : i32
    return %c0_i32, %c0_i32_0 : i32, i32
  }
  func.func @transform_8(%arg0: i32, %arg1: i32) -> (i32, i32) {
    %c0_i32 = arith.constant 0 : i32
    %c0_i32_0 = arith.constant 0 : i32
    %c0_i32_1 = arith.constant 0 : i32
    return %c0_i32, %c0_i32_0 : i32, i32
  }
  func.func @transform_9(%arg0: i32, %arg1: i32) -> (i32, i32) {
    %c0_i32 = arith.constant 0 : i32
    %c0_i32_0 = arith.constant 0 : i32
    %c0_i32_1 = arith.constant 0 : i32
    return %c0_i32, %c0_i32_0 : i32, i32
  }
  func.func @transform_10(%arg0: i32, %arg1: i32) -> (i32, i32) {
    %c0_i32 = arith.constant 0 : i32
    %c0_i32_0 = arith.constant 0 : i32
    %c0_i32_1 = arith.constant 0 : i32
    return %c0_i32, %c0_i32_0 : i32, i32
  }
  func.func @transform_11(%arg0: i32, %arg1: i32) -> (i32, i32) {
    %c0_i32 = arith.constant 0 : i32
    %c0_i32_0 = arith.constant 0 : i32
    %c0_i32_1 = arith.constant 0 : i32
    return %c0_i32, %c0_i32_0 : i32, i32
  }
  func.func @transform_12(%arg0: i32, %arg1: i32) -> (i32, i32) {
    %c0_i32 = arith.constant 0 : i32
    %c0_i32_0 = arith.constant 0 : i32
    %c0_i32_1 = arith.constant 0 : i32
    return %c0_i32, %c0_i32_0 : i32, i32
  }
  func.func @transform_13(%arg0: i32, %arg1: i32) -> (i32, i32) {
    %c0_i32 = arith.constant 0 : i32
    %c0_i32_0 = arith.constant 0 : i32
    %c0_i32_1 = arith.constant 0 : i32
    return %c0_i32, %c0_i32_0 : i32, i32
  }
  func.func @transform_14(%arg0: i32, %arg1: i32) -> (i32, i32, i32) {
    %c0_i32 = arith.constant 0 : i32
    %c0_i32_0 = arith.constant 0 : i32
    return %arg0, %arg1, %c0_i32 : i32, i32, i32
  }
}

</mosaic_0001>

<llo_original>
// kernel: tpu_custom_call.1
$region0: #{tpu_custom_call.1}
  #allocation0 [shape = 'u32[]', space=smem, size = 0x4, offset = 0x4, fixed_abs, tag = 'smem constant byte address 0x4 - core index']
  #allocation1 [shape = 'u32[144,128]{1,0:T(1,128)}', space=vmem, size = 0x12000, scoped, tag = 'internal scratch']
  #allocation2 [shape = 'bf16[128,256]{1,0:T(16,128)(2,1)}', space=vmem, size = 0x10000, scoped, tag = 'scratch operand']
  #allocation3 [shape = 'bf16[128,256]{1,0:T(16,128)(2,1)}', space=vmem, size = 0x10000, scoped, tag = 'scratch operand']
  %s0 = inlined_call_operand.hbm [shape: bf16[2,128,128], index: 0, kind: input, shape index: {}]
  %s1 = inlined_call_operand.hbm [shape: f32[2,128,128], index: 1, kind: input, shape index: {}]
  %s2 = inlined_call_operand.hbm [shape: f32[2,128,128], index: 2, kind: input, shape index: {}]
  %s3 = inlined_call_operand.hbm [shape: bf16[128,256], index: 3, kind: input, shape index: {}]
  %s4 = inlined_call_operand.hbm [shape: bf16[128,256], index: 4, kind: input, shape index: {}]
  %s5 = inlined_call_operand.hbm [shape: f32[1,256], index: 5, kind: input, shape index: {}]
  %s6 = inlined_call_operand.hbm [shape: f32[1,256], index: 6, kind: input, shape index: {}]
  %s7 = inlined_call_operand.hbm [shape: bf16[128,256], index: 7, kind: input, shape index: {}]
  %s8 = inlined_call_operand.hbm [shape: bf16[128,256], index: 8, kind: input, shape index: {}]
  %s9 = inlined_call_operand.hbm [shape: f32[1,256], index: 9, kind: input, shape index: {}]
  %s10 = inlined_call_operand.hbm [shape: f32[1,256], index: 10, kind: input, shape index: {}]
  %s11 = inlined_call_operand.hbm [shape: bf16[256,128], index: 11, kind: input, shape index: {}]
  %s12 = inlined_call_operand.hbm [shape: bf16[256,128], index: 12, kind: input, shape index: {}]
  %s13 = inlined_call_operand.hbm [shape: f32[1,128], index: 13, kind: input, shape index: {}]
  %s14 = inlined_call_operand.hbm [shape: f32[2,128,128], index: 14, kind: output, shape index: {}]
  %s15 = sld [smem:[#allocation0]]
  $region149: #{tpu_custom_call.1} parent=0
    _
  %s17 = ssub.s32 1, %s15
  %s18 = scalar_select 0, %s17, %s15
  $region1: #{tpu_custom_call.1} parent=0
    #allocation4 [shape = 'u8[65536]{0}', space=vmem, size = 0x10000, scoped, tag = 'input window, operand 0']
    #allocation5 [shape = 's32[2]{0}', space=sflag, size = 0x8, scoped, tag = 'scoped memory for tpu_custom_call.1']
    #allocation6 [shape = 's32[2]{0}', space=sflag, size = 0x8, scoped, tag = 'scoped memory for tpu_custom_call.1']
    #allocation7 [shape = 'u8[131072]{0}', space=vmem, size = 0x20000, scoped, tag = 'input window, operand 1']
    #allocation8 [shape = 's32[2]{0}', space=sflag, size = 0x8, scoped, tag = 'scoped memory for tpu_custom_call.1']
    #allocation9 [shape = 'u8[131072]{0}', space=vmem, size = 0x20000, scoped, tag = 'input window, operand 2']
    #allocation10 [shape = 'u8[65536]{0}', space=vmem, size = 0x10000, scoped, tag = 'input window, operand 3, single buffered']
    #allocation11 [shape = 's32[1]{0}', space=sflag, size = 0x4, scoped, tag = 'scoped memory for tpu_custom_call.1']
    #allocation12 [shape = 'u8[65536]{0}', space=vmem, size = 0x10000, scoped, tag = 'input window, operand 4, single buffered']
    #allocation13 [shape = 'u8[1024]{0}', space=vmem, size = 0x400, scoped, tag = 'input window, operand 5, single buffered']
    #allocation14 [shape = 's32[1]{0}', space=sflag, size = 0x4, scoped, tag = 'scoped memory for tpu_custom_call.1']
    #allocation15 [shape = 'u8[1024]{0}', space=vmem, size = 0x400, scoped, tag = 'input window, operand 6, single buffered']
    #allocation16 [shape = 'u8[65536]{0}', space=vmem, size = 0x10000, scoped, tag = 'input window, operand 7, single buffered']
    #allocation17 [shape = 's32[1]{0}', space=sflag, size = 0x4, scoped, tag = 'scoped memory for tpu_custom_call.1']
    #allocation18 [shape = 'u8[65536]{0}', space=vmem, size = 0x10000, scoped, tag = 'input window, operand 8, single buffered']
    #allocation19 [shape = 'u8[1024]{0}', space=vmem, size = 0x400, scoped, tag = 'input window, operand 9, single buffered']
    #allocation20 [shape = 's32[1]{0}', space=sflag, size = 0x4, scoped, tag = 'scoped memory for tpu_custom_call.1']
    #allocation21 [shape = 'u8[1024]{0}', space=vmem, size = 0x400, scoped, tag = 'input window, operand 10, single buffered']
    #allocation22 [shape = 'u8[65536]{0}', space=vmem, size = 0x10000, scoped, tag = 'input window, operand 11, single buffered']
    #allocation23 [shape = 's32[1]{0}', space=sflag, size = 0x4, scoped, tag = 'scoped memory for tpu_custom_call.1']
    #allocation24 [shape = 'u8[65536]{0}', space=vmem, size = 0x10000, scoped, tag = 'input window, operand 12, single buffered']
    #allocation25 [shape = 'u8[512]{0}', space=vmem, size = 0x400, scoped, tag = 'input window, operand 13, single buffered']
    #allocation26 [shape = 's32[1]{0}', space=sflag, size = 0x4, scoped, tag = 'scoped memory for tpu_custom_call.1']
    #allocation27 [shape = 'u8[131072]{0}', space=vmem, size = 0x20000, scoped, tag = 'output window, operand 0']
    %19 = vsyncpa [#allocation5], 0
    %s20 = scalar_lea.sflag [#allocation5], 1
    %21 = vsyncpa %s20, 0
    %22 = vsyncpa [#allocation8], 0
    %s23 = scalar_lea.sflag [#allocation8], 1
    %24 = vsyncpa %s23, 0
    %25 = vsyncpa [#allocation11], 0
    %26 = vsyncpa [#allocation14], 0
    %27 = vsyncpa [#allocation17], 0
    %28 = vsyncpa [#allocation20], 0
    %29 = vsyncpa [#allocation23], 0
    %30 = vsyncpa [#allocation26], 0
    %31 = vsyncpa [#allocation6], 0
    %s32 = scalar_lea.sflag [#allocation6], 1
    %33 = vsyncpa %s32, 0
    loop: start=0, step=1, limit=4
    $region2: #{tpu_custom_call.1} parent=1 // loop_pre_header
      _
    $region3: #{tpu_custom_call.1} parent=1 // loop_header
      %s35 = sphi 0, %s39
      %p36 = scmp.ge.s32.totalorder %s35, 4
      %s42 = sphi 0, %s54
      %s43 = sphi 0, %s50
      %s44 = sphi 0, %s42
      %s45 = sphi 0, %s43
      %s46 = sphi 0, %s44
      %s47 = sphi 0, %s45
      %s57 = sphi 0, %s59
      %s60 = sphi 0, %s57
      %s61 = sphi 0, %s60
      %s77 = sphi 0, %s61
      %s85 = sphi 0, %s87
      %s88 = sphi 0, %s85
      %s89 = sphi 0, %s88
      %s105 = sphi 0, %s89
      %s113 = sphi 0, %s115
      %s116 = sphi 0, %s113
      %s117 = sphi 0, %s116
      %s133 = sphi 0, %s117
      %s137 = sphi 0, %s137
      %s139 = sphi 0, %s137
      %s140 = sphi 0, %s139
      %s154 = sphi 0, %s140
      %s158 = sphi 0, %s158
      %s160 = sphi 0, %s158
      %s161 = sphi 0, %s160
      %s175 = sphi 0, %s161
      %s179 = sphi 0, %s179
      %s181 = sphi 0, %s179
      %s182 = sphi 0, %s181
      %s196 = sphi 0, %s182
      %s200 = sphi 0, %s200
      %s202 = sphi 0, %s200
      %s203 = sphi 0, %s202
      %s217 = sphi 0, %s203
      %s221 = sphi 0, %s221
      %s223 = sphi 0, %s221
      %s224 = sphi 0, %s223
      %s238 = sphi 0, %s224
      %s242 = sphi 0, %s242
      %s244 = sphi 0, %s242
      %s245 = sphi 0, %s244
      %s259 = sphi 0, %s245
      %s263 = sphi 0, %s263
      %s265 = sphi 0, %s263
      %s266 = sphi 0, %s265
      %s280 = sphi 0, %s266
      %s284 = sphi 0, %s284
      %s286 = sphi 0, %s284
      %s287 = sphi 0, %s286
      %s301 = sphi 0, %s287
      %s305 = sphi 0, %s305
      %s307 = sphi 0, %s305
      %s308 = sphi 0, %s307
      %s322 = sphi 0, %s308
      %s326 = sphi 0, %s326
      %s328 = sphi 0, %s326
      %s329 = sphi 0, %s328
      %s343 = sphi 0, %s329
      %s347 = sphi 0, %s347
      %s349 = sphi 0, %s347
      %s350 = sphi 0, %s349
      %s364 = sphi 0, %s350
      %s372 = sphi 0, %s374
      %s375 = sphi 0, %s372
      %s376 = sphi 0, %s375
      %s392 = sphi 0, %s376
    $region4: #{tpu_custom_call.1} parent=1 // loop_header_branch
      %38 = sbr.rel (%p36) target = $region8
    $region5: #{tpu_custom_call.1} parent=1 // loop_body
      %s40 = ssub.s32 %s35, 1
      %s41 = ssub.s32 %s35, 2
      %s48 = sadd.s32 1, %s43
      %p49 = scmp.ge.s32.totalorder %s48, 1
      %s50 = scalar_select %p49, 0, %s48
      %s51 = sadd.s32 1, %s42
      %s52 = scalar_select %p49, %s51, %s42
      %p53 = scmp.ge.s32.totalorder %s52, 2
      %s54 = scalar_select %p53, 0, %s52
      %s55 = ssub.s32 %s42, %s54
      %p56 = scmp.eq.s32.totalorder %s55, 0
      %s58 = sadd.s32 %s57, 1
      %s59 = scalar_select %p56, %s57, %s58
      %p62 = pneg %p56
      %p63 = scmp.eq.s32.totalorder %s35, 1
      %p64 = por %p62, %p63
      %p65 = scmp.ne.s32.totalorder %s57, %s60
      %p66 = scmp.eq.s32.totalorder %s35, 0
      %p67 = por %p65, %p66
      %p68 = scmp.ne.s32.totalorder %s57, %s60
      %p69 = scmp.eq.s32.totalorder %s40, 1
      %p70 = por %p68, %p69
      %p71 = scmp.ne.s32.totalorder %s60, %s61
      %p72 = scmp.eq.s32.totalorder %s40, 0
      %p73 = por %p71, %p72
      %p74 = scmp.ne.s32.totalorder %s60, %s61
      %p75 = scmp.eq.s32.totalorder %s41, 1
      %p76 = por %p74, %p75
      %p78 = scmp.ne.s32.totalorder %s61, %s77
      %p79 = scmp.eq.s32.totalorder %s41, 0
      %p80 = por %p78, %p79
      %s81 = ssub.s32 %s42, %s54
      %s82 = ssub.s32 %s43, %s50
      %s83 = sor.u32 %s81, %s82
      %p84 = scmp.eq.s32.totalorder %s83, 0
      %s86 = sadd.s32 %s85, 1
      %s87 = scalar_select %p84, %s85, %s86
      %p90 = pneg %p84
      %p91 = scmp.eq.s32.totalorder %s35, 1
      %p92 = por %p90, %p91
      %p93 = scmp.ne.s32.totalorder %s85, %s88
      %p94 = scmp.eq.s32.totalorder %s35, 0
      %p95 = por %p93, %p94
      %p96 = scmp.ne.s32.totalorder %s85, %s88
      %p97 = scmp.eq.s32.totalorder %s40, 1
      %p98 = por %p96, %p97
      %p99 = scmp.ne.s32.totalorder %s88, %s89
      %p100 = scmp.eq.s32.totalorder %s40, 0
      %p101 = por %p99, %p100
      %p102 = scmp.ne.s32.totalorder %s88, %s89
      %p103 = scmp.eq.s32.totalorder %s41, 1
      %p104 = por %p102, %p103
      %p106 = scmp.ne.s32.totalorder %s89, %s105
      %p107 = scmp.eq.s32.totalorder %s41, 0
      %p108 = por %p106, %p107
      %s109 = ssub.s32 %s42, %s54
      %s110 = ssub.s32 %s43, %s50
      %s111 = sor.u32 %s109, %s110
      %p112 = scmp.eq.s32.totalorder %s111, 0
      %s114 = sadd.s32 %s113, 1
      %s115 = scalar_select %p112, %s113, %s114
      %p118 = pneg %p112
      %p119 = scmp.eq.s32.totalorder %s35, 1
      %p120 = por %p118, %p119
      %p121 = scmp.ne.s32.totalorder %s113, %s116
      %p122 = scmp.eq.s32.totalorder %s35, 0
      %p123 = por %p121, %p122
      %p124 = scmp.ne.s32.totalorder %s113, %s116
      %p125 = scmp.eq.s32.totalorder %s40, 1
      %p126 = por %p124, %p125
      %p127 = scmp.ne.s32.totalorder %s116, %s117
      %p128 = scmp.eq.s32.totalorder %s40, 0
      %p129 = por %p127, %p128
      %p130 = scmp.ne.s32.totalorder %s116, %s117
      %p131 = scmp.eq.s32.totalorder %s41, 1
      %p132 = por %p130, %p131
      %p134 = scmp.ne.s32.totalorder %s117, %s133
      %p135 = scmp.eq.s32.totalorder %s41, 0
      %p136 = por %p134, %p135
      %s138 = sadd.s32 %s137, 1
      %p141 = scmp.eq.s32.totalorder %s35, 1
      %p142 = scmp.ne.s32.totalorder %s137, %s139
      %p143 = scmp.eq.s32.totalorder %s35, 0
      %p144 = por %p142, %p143
      %p145 = scmp.ne.s32.totalorder %s137, %s139
      %p146 = scmp.eq.s32.totalorder %s40, 1
      %p147 = por %p145, %p146
      %p148 = scmp.ne.s32.totalorder %s139, %s140
      %p149 = scmp.eq.s32.totalorder %s40, 0
      %p150 = por %p148, %p149
      %p151 = scmp.ne.s32.totalorder %s139, %s140
      %p152 = scmp.eq.s32.totalorder %s41, 1
      %p153 = por %p151, %p152
      %p155 = scmp.ne.s32.totalorder %s140, %s154
      %p156 = scmp.eq.s32.totalorder %s41, 0
      %p157 = por %p155, %p156
      %s159 = sadd.s32 %s158, 1
      %p162 = scmp.eq.s32.totalorder %s35, 1
      %p163 = scmp.ne.s32.totalorder %s158, %s160
      %p164 = scmp.eq.s32.totalorder %s35, 0
      %p165 = por %p163, %p164
      %p166 = scmp.ne.s32.totalorder %s158, %s160
      %p167 = scmp.eq.s32.totalorder %s40, 1
      %p168 = por %p166, %p167
      %p169 = scmp.ne.s32.totalorder %s160, %s161
      %p170 = scmp.eq.s32.totalorder %s40, 0
      %p171 = por %p169, %p170
      %p172 = scmp.ne.s32.totalorder %s160, %s161
      %p173 = scmp.eq.s32.totalorder %s41, 1
      %p174 = por %p172, %p173
      %p176 = scmp.ne.s32.totalorder %s161, %s175
      %p177 = scmp.eq.s32.totalorder %s41, 0
      %p178 = por %p176, %p177
      %s180 = sadd.s32 %s179, 1
      %p183 = scmp.eq.s32.totalorder %s35, 1
      %p184 = scmp.ne.s32.totalorder %s179, %s181
      %p185 = scmp.eq.s32.totalorder %s35, 0
      %p186 = por %p184, %p185
      %p187 = scmp.ne.s32.totalorder %s179, %s181
      %p188 = scmp.eq.s32.totalorder %s40, 1
      %p189 = por %p187, %p188
      %p190 = scmp.ne.s32.totalorder %s181, %s182
      %p191 = scmp.eq.s32.totalorder %s40, 0
      %p192 = por %p190, %p191
      %p193 = scmp.ne.s32.totalorder %s181, %s182
      %p194 = scmp.eq.s32.totalorder %s41, 1
      %p195 = por %p193, %p194
      %p197 = scmp.ne.s32.totalorder %s182, %s196
      %p198 = scmp.eq.s32.totalorder %s41, 0
      %p199 = por %p197, %p198
      %s201 = sadd.s32 %s200, 1
      %p204 = scmp.eq.s32.totalorder %s35, 1
      %p205 = scmp.ne.s32.totalorder %s200, %s202
      %p206 = scmp.eq.s32.totalorder %s35, 0
      %p207 = por %p205, %p206
      %p208 = scmp.ne.s32.totalorder %s200, %s202
      %p209 = scmp.eq.s32.totalorder %s40, 1
      %p210 = por %p208, %p209
      %p211 = scmp.ne.s32.totalorder %s202, %s203
      %p212 = scmp.eq.s32.totalorder %s40, 0
      %p213 = por %p211, %p212
      %p214 = scmp.ne.s32.totalorder %s202, %s203
      %p215 = scmp.eq.s32.totalorder %s41, 1
      %p216 = por %p214, %p215
      %p218 = scmp.ne.s32.totalorder %s203, %s217
      %p219 = scmp.eq.s32.totalorder %s41, 0
      %p220 = por %p218, %p219
      %s222 = sadd.s32 %s221, 1
      %p225 = scmp.eq.s32.totalorder %s35, 1
      %p226 = scmp.ne.s32.totalorder %s221, %s223
      %p227 = scmp.eq.s32.totalorder %s35, 0
      %p228 = por %p226, %p227
      %p229 = scmp.ne.s32.totalorder %s221, %s223
      %p230 = scmp.eq.s32.totalorder %s40, 1
      %p231 = por %p229, %p230
      %p232 = scmp.ne.s32.totalorder %s223, %s224
      %p233 = scmp.eq.s32.totalorder %s40, 0
      %p234 = por %p232, %p233
      %p235 = scmp.ne.s32.totalorder %s223, %s224
      %p236 = scmp.eq.s32.totalorder %s41, 1
      %p237 = por %p235, %p236
      %p239 = scmp.ne.s32.totalorder %s224, %s238
      %p240 = scmp.eq.s32.totalorder %s41, 0
      %p241 = por %p239, %p240
      %s243 = sadd.s32 %s242, 1
      %p246 = scmp.eq.s32.totalorder %s35, 1
      %p247 = scmp.ne.s32.totalorder %s242, %s244
      %p248 = scmp.eq.s32.totalorder %s35, 0
      %p249 = por %p247, %p248
      %p250 = scmp.ne.s32.totalorder %s242, %s244
      %p251 = scmp.eq.s32.totalorder %s40, 1
      %p252 = por %p250, %p251
      %p253 = scmp.ne.s32.totalorder %s244, %s245
      %p254 = scmp.eq.s32.totalorder %s40, 0
      %p255 = por %p253, %p254
      %p256 = scmp.ne.s32.totalorder %s244, %s245
      %p257 = scmp.eq.s32.totalorder %s41, 1
      %p258 = por %p256, %p257
      %p260 = scmp.ne.s32.totalorder %s245, %s259
      %p261 = scmp.eq.s32.totalorder %s41, 0
      %p262 = por %p260, %p261
      %s264 = sadd.s32 %s263, 1
      %p267 = scmp.eq.s32.totalorder %s35, 1
      %p268 = scmp.ne.s32.totalorder %s263, %s265
      %p269 = scmp.eq.s32.totalorder %s35, 0
      %p270 = por %p268, %p269
      %p271 = scmp.ne.s32.totalorder %s263, %s265
      %p272 = scmp.eq.s32.totalorder %s40, 1
      %p273 = por %p271, %p272
      %p274 = scmp.ne.s32.totalorder %s265, %s266
      %p275 = scmp.eq.s32.totalorder %s40, 0
      %p276 = por %p274, %p275
      %p277 = scmp.ne.s32.totalorder %s265, %s266
      %p278 = scmp.eq.s32.totalorder %s41, 1
      %p279 = por %p277, %p278
      %p281 = scmp.ne.s32.totalorder %s266, %s280
      %p282 = scmp.eq.s32.totalorder %s41, 0
      %p283 = por %p281, %p282
      %s285 = sadd.s32 %s284, 1
      %p288 = scmp.eq.s32.totalorder %s35, 1
      %p289 = scmp.ne.s32.totalorder %s284, %s286
      %p290 = scmp.eq.s32.totalorder %s35, 0
      %p291 = por %p289, %p290
      %p292 = scmp.ne.s32.totalorder %s284, %s286
      %p293 = scmp.eq.s32.totalorder %s40, 1
      %p294 = por %p292, %p293
      %p295 = scmp.ne.s32.totalorder %s286, %s287
      %p296 = scmp.eq.s32.totalorder %s40, 0
      %p297 = por %p295, %p296
      %p298 = scmp.ne.s32.totalorder %s286, %s287
      %p299 = scmp.eq.s32.totalorder %s41, 1
      %p300 = por %p298, %p299
      %p302 = scmp.ne.s32.totalorder %s287, %s301
      %p303 = scmp.eq.s32.totalorder %s41, 0
      %p304 = por %p302, %p303
      %s306 = sadd.s32 %s305, 1
      %p309 = scmp.eq.s32.totalorder %s35, 1
      %p310 = scmp.ne.s32.totalorder %s305, %s307
      %p311 = scmp.eq.s32.totalorder %s35, 0
      %p312 = por %p310, %p311
      %p313 = scmp.ne.s32.totalorder %s305, %s307
      %p314 = scmp.eq.s32.totalorder %s40, 1
      %p315 = por %p313, %p314
      %p316 = scmp.ne.s32.totalorder %s307, %s308
      %p317 = scmp.eq.s32.totalorder %s40, 0
      %p318 = por %p316, %p317
      %p319 = scmp.ne.s32.totalorder %s307, %s308
      %p320 = scmp.eq.s32.totalorder %s41, 1
      %p321 = por %p319, %p320
      %p323 = scmp.ne.s32.totalorder %s308, %s322
      %p324 = scmp.eq.s32.totalorder %s41, 0
      %p325 = por %p323, %p324
      %s327 = sadd.s32 %s326, 1
      %p330 = scmp.eq.s32.totalorder %s35, 1
      %p331 = scmp.ne.s32.totalorder %s326, %s328
      %p332 = scmp.eq.s32.totalorder %s35, 0
      %p333 = por %p331, %p332
      %p334 = scmp.ne.s32.totalorder %s326, %s328
      %p335 = scmp.eq.s32.totalorder %s40, 1
      %p336 = por %p334, %p335
      %p337 = scmp.ne.s32.totalorder %s328, %s329
      %p338 = scmp.eq.s32.totalorder %s40, 0
      %p339 = por %p337, %p338
      %p340 = scmp.ne.s32.totalorder %s328, %s329
      %p341 = scmp.eq.s32.totalorder %s41, 1
      %p342 = por %p340, %p341
      %p344 = scmp.ne.s32.totalorder %s329, %s343
      %p345 = scmp.eq.s32.totalorder %s41, 0
      %p346 = por %p344, %p345
      %s348 = sadd.s32 %s347, 1
      %p351 = scmp.eq.s32.totalorder %s35, 1
      %p352 = scmp.ne.s32.totalorder %s347, %s349
      %p353 = scmp.eq.s32.totalorder %s35, 0
      %p354 = por %p352, %p353
      %p355 = scmp.ne.s32.totalorder %s347, %s349
      %p356 = scmp.eq.s32.totalorder %s40, 1
      %p357 = por %p355, %p356
      %p358 = scmp.ne.s32.totalorder %s349, %s350
      %p359 = scmp.eq.s32.totalorder %s40, 0
      %p360 = por %p358, %p359
      %p361 = scmp.ne.s32.totalorder %s349, %s350
      %p362 = scmp.eq.s32.totalorder %s41, 1
      %p363 = por %p361, %p362
      %p365 = scmp.ne.s32.totalorder %s350, %s364
      %p366 = scmp.eq.s32.totalorder %s41, 0
      %p367 = por %p365, %p366
      %s368 = ssub.s32 %s42, %s54
      %s369 = ssub.s32 %s43, %s50
      %s370 = sor.u32 %s368, %s369
      %p371 = scmp.eq.s32.totalorder %s370, 0
      %s373 = sadd.s32 %s372, 1
      %s374 = scalar_select %p371, %s372, %s373
      %p377 = pneg %p371
      %p378 = scmp.eq.s32.totalorder %s35, 1
      %p379 = por %p377, %p378
      %p380 = scmp.ne.s32.totalorder %s372, %s375
      %p381 = scmp.eq.s32.totalorder %s35, 0
      %p382 = por %p380, %p381
      %p383 = scmp.ne.s32.totalorder %s372, %s375
      %p384 = scmp.eq.s32.totalorder %s40, 1
      %p385 = por %p383, %p384
      %p386 = scmp.ne.s32.totalorder %s375, %s376
      %p387 = scmp.eq.s32.totalorder %s40, 0
      %p388 = por %p386, %p387
      %p389 = scmp.ne.s32.totalorder %s375, %s376
      %p390 = scmp.eq.s32.totalorder %s41, 1
      %p391 = por %p389, %p390
      %p393 = scmp.ne.s32.totalorder %s376, %s392
      %p394 = scmp.eq.s32.totalorder %s41, 0
      %p395 = por %p393, %p394
      %p396 = scmp.le.s32.totalorder 1, %s35
      %p397 = scmp.lt.s32.totalorder %s35, 3
      %p398 = pnand %p396, %p397
      %p399 = pneg %p398
      // Predicated region
      $region9: #{tpu_custom_call.1} parent=5 // pred_check
        _
      $region10: #{tpu_custom_call.1} parent=5 // pred_check_branch
        %401 = sbr.rel (%p398) target = $region12
      $region11: #{tpu_custom_call.1} parent=5 // pred_region
        %s402 = ssub.s32 %s35, 1
        // Predicated region
        $region13: #{tpu_custom_call.1} parent=11 // pred_check
          %p403 = pneg %p150
        $region14: #{tpu_custom_call.1} parent=11 // pred_check_branch
          %405 = sbr.rel (%p403) target = $region16
        $region15: #{tpu_custom_call.1} parent=11 // pred_region
          %s407 = ssub.s32 2048, 2048
          %408 = vsyncadd [#allocation11], %s407
          %s409 = sshll.u32 [#allocation10], 4
          %s410 = int_to_ptr.vmem [resolvable:$true] %s409
          %415 = dma.hbm_to_vmem [thread:$0]  %s3, 2048, %s410, [#allocation11], 128, 128, 8
        $region16: #{tpu_custom_call.1} parent=11 // pred_fallthru
          _
        // Predicated region
        $region17: #{tpu_custom_call.1} parent=11 // pred_check
          %p416 = pneg %p171
        $region18: #{tpu_custom_call.1} parent=11 // pred_check_branch
          %418 = sbr.rel (%p416) target = $region20
        $region19: #{tpu_custom_call.1} parent=11 // pred_region
          %s420 = ssub.s32 2048, 2048
          %421 = vsyncadd [#allocation11], %s420
          %s422 = sshll.u32 [#allocation12], 4
          %s423 = int_to_ptr.vmem [resolvable:$true] %s422
          %428 = dma.hbm_to_vmem [thread:$0]  %s4, 2048, %s423, [#allocation11], 128, 128, 8
        $region20: #{tpu_custom_call.1} parent=11 // pred_fallthru
          _
        // Predicated region
        $region21: #{tpu_custom_call.1} parent=11 // pred_check
          %p429 = pneg %p192
        $region22: #{tpu_custom_call.1} parent=11 // pred_check_branch
          %431 = sbr.rel (%p429) target = $region24
        $region23: #{tpu_custom_call.1} parent=11 // pred_region
          %s433 = ssub.s32 32, 32
          %434 = vsyncadd [#allocation14], %s433
          %s436 = sshll.u32 [#allocation13], 4
          %s437 = int_to_ptr.vmem [resolvable:$true] %s436
          %439 = dma.hbm_to_vmem [thread:$0]  %s5, 32, %s437, [#allocation14]
        $region24: #{tpu_custom_call.1} parent=11 // pred_fallthru
          _
        // Predicated region
        $region25: #{tpu_custom_call.1} parent=11 // pred_check
          %p440 = pneg %p213
        $region26: #{tpu_custom_call.1} parent=11 // pred_check_branch
          %442 = sbr.rel (%p440) target = $region28
        $region27: #{tpu_custom_call.1} parent=11 // pred_region
          %s444 = ssub.s32 32, 32
          %445 = vsyncadd [#allocation14], %s444
          %s447 = sshll.u32 [#allocation15], 4
          %s448 = int_to_ptr.vmem [resolvable:$true] %s447
          %450 = dma.hbm_to_vmem [thread:$0]  %s6, 32, %s448, [#allocation14]
        $region28: #{tpu_custom_call.1} parent=11 // pred_fallthru
          _
        // Predicated region
        $region29: #{tpu_custom_call.1} parent=11 // pred_check
          %p451 = pneg %p234
        $region30: #{tpu_custom_call.1} parent=11 // pred_check_branch
          %453 = sbr.rel (%p451) target = $region32
        $region31: #{tpu_custom_call.1} parent=11 // pred_region
          %s455 = ssub.s32 2048, 2048
          %456 = vsyncadd [#allocation17], %s455
          %s457 = sshll.u32 [#allocation16], 4
          %s458 = int_to_ptr.vmem [resolvable:$true] %s457
          %463 = dma.hbm_to_vmem [thread:$0]  %s7, 2048, %s458, [#allocation17], 128, 128, 8
        $region32: #{tpu_custom_call.1} parent=11 // pred_fallthru
          _
        // Predicated region
        $region33: #{tpu_custom_call.1} parent=11 // pred_check
          %p464 = pneg %p255
        $region34: #{tpu_custom_call.1} parent=11 // pred_check_branch
          %466 = sbr.rel (%p464) target = $region36
        $region35: #{tpu_custom_call.1} parent=11 // pred_region
          %s468 = ssub.s32 2048, 2048
          %469 = vsyncadd [#allocation17], %s468
          %s470 = sshll.u32 [#allocation18], 4
          %s471 = int_to_ptr.vmem [resolvable:$true] %s470
          %476 = dma.hbm_to_vmem [thread:$0]  %s8, 2048, %s471, [#allocation17], 128, 128, 8
        $region36: #{tpu_custom_call.1} parent=11 // pred_fallthru
          _
        // Predicated region
        $region37: #{tpu_custom_call.1} parent=11 // pred_check
          %p477 = pneg %p276
        $region38: #{tpu_custom_call.1} parent=11 // pred_check_branch
          %479 = sbr.rel (%p477) target = $region40
        $region39: #{tpu_custom_call.1} parent=11 // pred_region
          %s481 = ssub.s32 32, 32
          %482 = vsyncadd [#allocation20], %s481
          %s484 = sshll.u32 [#allocation19], 4
          %s485 = int_to_ptr.vmem [resolvable:$true] %s484
          %487 = dma.hbm_to_vmem [thread:$0]  %s9, 32, %s485, [#allocation20]
        $region40: #{tpu_custom_call.1} parent=11 // pred_fallthru
          _
        // Predicated region
        $region41: #{tpu_custom_call.1} parent=11 // pred_check
          %p488 = pneg %p297
        $region42: #{tpu_custom_call.1} parent=11 // pred_check_branch
          %490 = sbr.rel (%p488) target = $region44
        $region43: #{tpu_custom_call.1} parent=11 // pred_region
          %s492 = ssub.s32 32, 32
          %493 = vsyncadd [#allocation20], %s492
          %s495 = sshll.u32 [#allocation21], 4
          %s496 = int_to_ptr.vmem [resolvable:$true] %s495
          %498 = dma.hbm_to_vmem [thread:$0]  %s10, 32, %s496, [#allocation20]
        $region44: #{tpu_custom_call.1} parent=11 // pred_fallthru
          _
        // Predicated region
        $region45: #{tpu_custom_call.1} parent=11 // pred_check
          %p499 = pneg %p318
        $region46: #{tpu_custom_call.1} parent=11 // pred_check_branch
          %501 = sbr.rel (%p499) target = $region48
        $region47: #{tpu_custom_call.1} parent=11 // pred_region
          %s503 = ssub.s32 2048, 2048
          %504 = vsyncadd [#allocation23], %s503
          %s505 = sshll.u32 [#allocation22], 4
          %s506 = int_to_ptr.vmem [resolvable:$true] %s505
          %511 = dma.hbm_to_vmem [thread:$0]  %s11, 2048, %s506, [#allocation23], 64, 64, 4
        $region48: #{tpu_custom_call.1} parent=11 // pred_fallthru
          _
        // Predicated region
        $region49: #{tpu_custom_call.1} parent=11 // pred_check
          %p512 = pneg %p339
        $region50: #{tpu_custom_call.1} parent=11 // pred_check_branch
          %514 = sbr.rel (%p512) target = $region52
        $region51: #{tpu_custom_call.1} parent=11 // pred_region
          %s516 = ssub.s32 2048, 2048
          %517 = vsyncadd [#allocation23], %s516
          %s518 = sshll.u32 [#allocation24], 4
          %s519 = int_to_ptr.vmem [resolvable:$true] %s518
          %524 = dma.hbm_to_vmem [thread:$0]  %s12, 2048, %s519, [#allocation23], 64, 64, 4
        $region52: #{tpu_custom_call.1} parent=11 // pred_fallthru
          _
        // Predicated region
        $region53: #{tpu_custom_call.1} parent=11 // pred_check
          %p525 = pneg %p360
        $region54: #{tpu_custom_call.1} parent=11 // pred_check_branch
          %527 = sbr.rel (%p525) target = $region56
        $region55: #{tpu_custom_call.1} parent=11 // pred_region
          %s529 = ssub.s32 16, 16
          %530 = vsyncadd [#allocation26], %s529
          %s532 = sshll.u32 [#allocation25], 4
          %s533 = int_to_ptr.vmem [resolvable:$true] %s532
          %535 = dma.hbm_to_vmem [thread:$0]  %s13, 16, %s533, [#allocation26]
        $region56: #{tpu_custom_call.1} parent=11 // pred_fallthru
          _
      $region12: #{tpu_custom_call.1} parent=5 // pred_fallthru
        _
      %p536 = scmp.lt.s32.totalorder %s35, 2
      // Predicated region
      $region57: #{tpu_custom_call.1} parent=5 // pred_check
        %p537 = pneg %p536
      $region58: #{tpu_custom_call.1} parent=5 // pred_check_branch
        %539 = sbr.rel (%p537) target = $region60
      $region59: #{tpu_custom_call.1} parent=5 // pred_region
        // Predicated region
        $region61: #{tpu_custom_call.1} parent=59 // pred_check
          %p540 = pneg %p67
        $region62: #{tpu_custom_call.1} parent=59 // pred_check_branch
          %542 = sbr.rel (%p540) target = $region64
        $region63: #{tpu_custom_call.1} parent=59 // pred_region
          %s543 = sand.u32 %s57, 1
          %s544 = scalar_lea.sflag [#allocation5], %s543
          %s545 = sand.u32 %s57, 1
          %s546 = smul.addr %s545, 64
          %s547 = scalar_lea.vmem [#allocation4], %s546
          %s549 = ssub.s32 1024, 1024
          %550 = vsyncadd %s544, %s549
          %s551 = smul.addr %s42, 16
          %s552 = smul.addr %s551, 64
          %s553 = scalar_lea.hbm %s0, %s552
          %s554 = sshll.u32 %s547, 4
          %s555 = int_to_ptr.vmem [resolvable:$true] %s554
          %560 = dma.hbm_to_vmem [thread:$0]  %s553, 1024, %s555, %s544, 64, 64, 4
        $region64: #{tpu_custom_call.1} parent=59 // pred_fallthru
          _
        // Predicated region
        $region65: #{tpu_custom_call.1} parent=59 // pred_check
          %p561 = pneg %p95
        $region66: #{tpu_custom_call.1} parent=59 // pred_check_branch
          %563 = sbr.rel (%p561) target = $region68
        $region67: #{tpu_custom_call.1} parent=59 // pred_region
          %s564 = sand.u32 %s35, 1
          %s565 = scalar_lea.sflag [#allocation8], %s564
          %s566 = sand.u32 %s85, 1
          %s567 = smul.addr %s566, 128
          %s568 = scalar_lea.vmem [#allocation7], %s567
          %s569 = smul.u32 16, %s43
          %s571 = ssub.s32 2048, 2048
          %572 = vsyncadd %s565, %s571
          %s573 = smul.addr %s42, 16
          %s574 = sadd.s32 %s569, %s573
          %s575 = smul.addr %s574, 128
          %s576 = scalar_lea.hbm %s1, %s575
          %s577 = sshll.u32 %s568, 4
          %s578 = int_to_ptr.vmem [resolvable:$true] %s577
          %583 = dma.hbm_to_vmem [thread:$0]  %s576, 2048, %s578, %s565, 128, 128, 8
        $region68: #{tpu_custom_call.1} parent=59 // pred_fallthru
          _
        // Predicated region
        $region69: #{tpu_custom_call.1} parent=59 // pred_check
          %p584 = pneg %p123
        $region70: #{tpu_custom_call.1} parent=59 // pred_check_branch
          %586 = sbr.rel (%p584) target = $region72
        $region71: #{tpu_custom_call.1} parent=59 // pred_region
          %s587 = sand.u32 %s35, 1
          %s588 = scalar_lea.sflag [#allocation8], %s587
          %s589 = sand.u32 %s113, 1
          %s590 = smul.addr %s589, 128
          %s591 = scalar_lea.vmem [#allocation9], %s590
          %s593 = ssub.s32 2048, 2048
          %594 = vsyncadd %s588, %s593
          %s595 = smul.addr %s42, 16
          %s596 = sadd.s32 %s43, %s595
          %s597 = smul.addr %s596, 128
          %s598 = scalar_lea.hbm %s2, %s597
          %s599 = sshll.u32 %s591, 4
          %s600 = int_to_ptr.vmem [resolvable:$true] %s599
          %605 = dma.hbm_to_vmem [thread:$0]  %s598, 2048, %s600, %s588, 128, 128, 8
        $region72: #{tpu_custom_call.1} parent=59 // pred_fallthru
          _
      $region60: #{tpu_custom_call.1} parent=5 // pred_fallthru
        _
      %p606 = scmp.le.s32.totalorder 1, %s35
      %p607 = scmp.lt.s32.totalorder %s35, 3
      %p608 = pnand %p606, %p607
      %p609 = pneg %p608
      // Predicated region
      $region73: #{tpu_custom_call.1} parent=5 // pred_check
        _
      $region74: #{tpu_custom_call.1} parent=5 // pred_check_branch
        %611 = sbr.rel (%p608) target = $region76
      $region75: #{tpu_custom_call.1} parent=5 // pred_region
        %s612 = ssub.s32 %s35, 1
        %s613 = sand.u32 %s60, 1
        %s614 = scalar_lea.sflag [#allocation5], %s613
        %s615 = sand.u32 %s60, 1
        %s616 = smul.addr %s615, 64
        %s617 = scalar_lea.vmem [#allocation4], %s616
        // Predicated region
        $region77: #{tpu_custom_call.1} parent=75 // pred_check
          %p618 = pneg %p73
        $region78: #{tpu_custom_call.1} parent=75 // pred_check_branch
          %620 = sbr.rel (%p618) target = $region80
        $region79: #{tpu_custom_call.1} parent=75 // pred_region
          %621 = dma.done %s614, 1024
        $region80: #{tpu_custom_call.1} parent=75 // pred_fallthru
          _
        %s622 = sand.u32 %s40, 1
        %s623 = scalar_lea.sflag [#allocation8], %s622
        %s624 = sand.u32 %s88, 1
        %s625 = smul.addr %s624, 128
        %s626 = scalar_lea.vmem [#allocation7], %s625
        // Predicated region
        $region81: #{tpu_custom_call.1} parent=75 // pred_check
          %p627 = pneg %p101
        $region82: #{tpu_custom_call.1} parent=75 // pred_check_branch
          %629 = sbr.rel (%p627) target = $region84
        $region83: #{tpu_custom_call.1} parent=75 // pred_region
          %630 = dma.done %s623, 2048
        $region84: #{tpu_custom_call.1} parent=75 // pred_fallthru
          _
        %s631 = sand.u32 %s40, 1
        %s632 = scalar_lea.sflag [#allocation8], %s631
        %s633 = sand.u32 %s116, 1
        %s634 = smul.addr %s633, 128
        %s635 = scalar_lea.vmem [#allocation9], %s634
        // Predicated region
        $region85: #{tpu_custom_call.1} parent=75 // pred_check
          %p636 = pneg %p129
        $region86: #{tpu_custom_call.1} parent=75 // pred_check_branch
          %638 = sbr.rel (%p636) target = $region88
        $region87: #{tpu_custom_call.1} parent=75 // pred_region
          %639 = dma.done %s632, 2048
        $region88: #{tpu_custom_call.1} parent=75 // pred_fallthru
          _
        // Predicated region
        $region89: #{tpu_custom_call.1} parent=75 // pred_check
          %p640 = pneg %p150
        $region90: #{tpu_custom_call.1} parent=75 // pred_check_branch
          %642 = sbr.rel (%p640) target = $region92
        $region91: #{tpu_custom_call.1} parent=75 // pred_region
          %643 = dma.done [#allocation11], 2048
        $region92: #{tpu_custom_call.1} parent=75 // pred_fallthru
          _
        // Predicated region
        $region93: #{tpu_custom_call.1} parent=75 // pred_check
          %p644 = pneg %p171
        $region94: #{tpu_custom_call.1} parent=75 // pred_check_branch
          %646 = sbr.rel (%p644) target = $region96
        $region95: #{tpu_custom_call.1} parent=75 // pred_region
          %647 = dma.done [#allocation11], 2048
        $region96: #{tpu_custom_call.1} parent=75 // pred_fallthru
          _
        // Predicated region
        $region97: #{tpu_custom_call.1} parent=75 // pred_check
          %p648 = pneg %p192
        $region98: #{tpu_custom_call.1} parent=75 // pred_check_branch
          %650 = sbr.rel (%p648) target = $region100
        $region99: #{tpu_custom_call.1} parent=75 // pred_region
          %651 = dma.done [#allocation14], 32
        $region100: #{tpu_custom_call.1} parent=75 // pred_fallthru
          _
        // Predicated region
        $region101: #{tpu_custom_call.1} parent=75 // pred_check
          %p652 = pneg %p213
        $region102: #{tpu_custom_call.1} parent=75 // pred_check_branch
          %654 = sbr.rel (%p652) target = $region104
        $region103: #{tpu_custom_call.1} parent=75 // pred_region
          %655 = dma.done [#allocation14], 32
        $region104: #{tpu_custom_call.1} parent=75 // pred_fallthru
          _
        // Predicated region
        $region105: #{tpu_custom_call.1} parent=75 // pred_check
          %p656 = pneg %p234
        $region106: #{tpu_custom_call.1} parent=75 // pred_check_branch
          %658 = sbr.rel (%p656) target = $region108
        $region107: #{tpu_custom_call.1} parent=75 // pred_region
          %659 = dma.done [#allocation17], 2048
        $region108: #{tpu_custom_call.1} parent=75 // pred_fallthru
          _
        // Predicated region
        $region109: #{tpu_custom_call.1} parent=75 // pred_check
          %p660 = pneg %p255
        $region110: #{tpu_custom_call.1} parent=75 // pred_check_branch
          %662 = sbr.rel (%p660) target = $region112
        $region111: #{tpu_custom_call.1} parent=75 // pred_region
          %663 = dma.done [#allocation17], 2048
        $region112: #{tpu_custom_call.1} parent=75 // pred_fallthru
          _
        // Predicated region
        $region113: #{tpu_custom_call.1} parent=75 // pred_check
          %p664 = pneg %p276
        $region114: #{tpu_custom_call.1} parent=75 // pred_check_branch
          %666 = sbr.rel (%p664) target = $region116
        $region115: #{tpu_custom_call.1} parent=75 // pred_region
          %667 = dma.done [#allocation20], 32
        $region116: #{tpu_custom_call.1} parent=75 // pred_fallthru
          _
        // Predicated region
        $region117: #{tpu_custom_call.1} parent=75 // pred_check
          %p668 = pneg %p297
        $region118: #{tpu_custom_call.1} parent=75 // pred_check_branch
          %670 = sbr.rel (%p668) target = $region120
        $region119: #{tpu_custom_call.1} parent=75 // pred_region
          %671 = dma.done [#allocation20], 32
        $region120: #{tpu_custom_call.1} parent=75 // pred_fallthru
          _
        // Predicated region
        $region121: #{tpu_custom_call.1} parent=75 // pred_check
          %p672 = pneg %p318
        $region122: #{tpu_custom_call.1} parent=75 // pred_check_branch
          %674 = sbr.rel (%p672) target = $region124
        $region123: #{tpu_custom_call.1} parent=75 // pred_region
          %675 = dma.done [#allocation23], 2048
        $region124: #{tpu_custom_call.1} parent=75 // pred_fallthru
          _
        // Predicated region
        $region125: #{tpu_custom_call.1} parent=75 // pred_check
          %p676 = pneg %p339
        $region126: #{tpu_custom_call.1} parent=75 // pred_check_branch
          %678 = sbr.rel (%p676) target = $region128
        $region127: #{tpu_custom_call.1} parent=75 // pred_region
          %679 = dma.done [#allocation23], 2048
        $region128: #{tpu_custom_call.1} parent=75 // pred_fallthru
          _
        // Predicated region
        $region129: #{tpu_custom_call.1} parent=75 // pred_check
          %p680 = pneg %p360
        $region130: #{tpu_custom_call.1} parent=75 // pred_check_branch
          %682 = sbr.rel (%p680) target = $region132
        $region131: #{tpu_custom_call.1} parent=75 // pred_region
          %683 = dma.done [#allocation26], 16
        $region132: #{tpu_custom_call.1} parent=75 // pred_fallthru
          _
        %s684 = sand.u32 %s60, 1
        %s685 = scalar_lea.sflag [#allocation5], %s684
        %s686 = sand.u32 %s60, 1
        %s687 = smul.addr %s686, 64
        %s688 = scalar_lea.vmem [#allocation4], %s687
        %p689 = pneg %p73
        %p690 = pneg %p70
        %s691 = sand.u32 %s40, 1
        %s692 = scalar_lea.sflag [#allocation8], %s691
        %s693 = sand.u32 %s88, 1
        %s694 = smul.addr %s693, 128
        %s695 = scalar_lea.vmem [#allocation7], %s694
        %p696 = pneg %p101
        %p697 = pneg %p98
        %s698 = sand.u32 %s40, 1
        %s699 = scalar_lea.sflag [#allocation8], %s698
        %s700 = sand.u32 %s116, 1
        %s701 = smul.addr %s700, 128
        %s702 = scalar_lea.vmem [#allocation9], %s701
        %p703 = pneg %p129
        %p704 = pneg %p126
        %p705 = pneg %p150
        %p706 = pneg %p147
        %p707 = pneg %p171
        %p708 = pneg %p168
        %p709 = pneg %p192
        %p710 = pneg %p189
        %p711 = pneg %p213
        %p712 = pneg %p210
        %p713 = pneg %p234
        %p714 = pneg %p231
        %p715 = pneg %p255
        %p716 = pneg %p252
        %p717 = pneg %p276
        %p718 = pneg %p273
        %p719 = pneg %p297
        %p720 = pneg %p294
        %p721 = pneg %p318
        %p722 = pneg %p315
        %p723 = pneg %p339
        %p724 = pneg %p336
        %p725 = pneg %p360
        %p726 = pneg %p357
        %p727 = pneg %p388
        %p728 = pneg %p385
        %s729 = sand.u32 %s375, 1
        %s730 = scalar_lea.sflag [#allocation6], %s729
        %s731 = sand.u32 %s375, 1
        %s732 = smul.addr %s731, 128
        %s733 = scalar_lea.vmem [#allocation27], %s732
        %s734 = smul.u32 16, %s45
        %s735 = smul.u32 16, %s45
        %p737 = scmp.eq.s32.totalorder %s45, 0
        // Predicated region
        $region133: #{tpu_custom_call.1} parent=75 // pred_check
          %p738 = pneg %p737
        $region134: #{tpu_custom_call.1} parent=75 // pred_check_branch
          %740 = sbr.rel (%p738) target = $region136
        $region135: #{tpu_custom_call.1} parent=75 // pred_region
          %v741 = vld [vmem:[%s617] sm:$0xf]
          %v742 = vld [vmem:[%s617 + $0x4] sm:$0xf]
          %v743 = vld [vmem:[%s617 + $0x8] sm:$0xf]
          %v744 = vld [vmem:[%s617 + $0xc] sm:$0xf]
          %v745 = vld [vmem:[%s617 + $0x10] sm:$0xf]
          %v746 = vld [vmem:[%s617 + $0x14] sm:$0xf]
          %v747 = vld [vmem:[%s617 + $0x18] sm:$0xf]
          %v748 = vld [vmem:[%s617 + $0x1c] sm:$0xf]
          %v749 = vld [vmem:[%s617 + $0x20] sm:$0xf]
          %v750 = vld [vmem:[%s617 + $0x24] sm:$0xf]
          %v751 = vld [vmem:[%s617 + $0x28] sm:$0xf]
          %v752 = vld [vmem:[%s617 + $0x2c] sm:$0xf]
          %v753 = vld [vmem:[%s617 + $0x30] sm:$0xf]
          %v754 = vld [vmem:[%s617 + $0x34] sm:$0xf]
          %v755 = vld [vmem:[%s617 + $0x38] sm:$0xf]
          %v756 = vld [vmem:[%s617 + $0x3c] sm:$0xf]
          %v757 = vld [vmem:[#allocation16] sm:$0xff]
          %v758 = vld [vmem:[#allocation16 + $0x8] sm:$0xff]
          %v759 = vld [vmem:[#allocation16 + $0x10] sm:$0xff]
          %v760 = vld [vmem:[#allocation16 + $0x18] sm:$0xff]
          %v761 = vld [vmem:[#allocation16 + $0x20] sm:$0xff]
          %v762 = vld [vmem:[#allocation16 + $0x28] sm:$0xff]
          %v763 = vld [vmem:[#allocation16 + $0x30] sm:$0xff]
          %v764 = vld [vmem:[#allocation16 + $0x38] sm:$0xff]
          %v765 = vld [vmem:[#allocation16 + $0x40] sm:$0xff]
          %v766 = vld [vmem:[#allocation16 + $0x48] sm:$0xff]
          %v767 = vld [vmem:[#allocation16 + $0x50] sm:$0xff]
          %v768 = vld [vmem:[#allocation16 + $0x58] sm:$0xff]
          %v769 = vld [vmem:[#allocation16 + $0x60] sm:$0xff]
          %v770 = vld [vmem:[#allocation16 + $0x68] sm:$0xff]
          %v771 = vld [vmem:[#allocation16 + $0x70] sm:$0xff]
          %v772 = vld [vmem:[#allocation16 + $0x78] sm:$0xff]
          %v773 = vld [vmem:[#allocation19] sm:$0x3]
          %v775 = vlaneseq
          %v776 = vshrl.u32 %v775, 7
          %v777 = vsub.s32 0, %v776
          %v778 = vrot.slane %v773, %v777
          %v779 = vlaneseq
          %v780 = vshrl.u32 %v779, 7
          %v781 = vsub.s32 1, %v780
          %v782 = vrot.slane %v773, %v781
          %v801 = vunpack.c.l.b16 %v741
          %v802 = vunpack.c.l.b16 %v742
          %v803 = vunpack.c.l.b16 %v743
          %v804 = vunpack.c.l.b16 %v744
          %v805 = vunpack.c.l.b16 %v745
          %v806 = vunpack.c.l.b16 %v746
          %v807 = vunpack.c.l.b16 %v747
          %v808 = vunpack.c.l.b16 %v748
          %v809 = vunpack.c.l.b16 %v749
          %v810 = vunpack.c.l.b16 %v750
          %v811 = vunpack.c.l.b16 %v751
          %v812 = vunpack.c.l.b16 %v752
          %v813 = vunpack.c.l.b16 %v753
          %v814 = vunpack.c.l.b16 %v754
          %v815 = vunpack.c.l.b16 %v755
          %v816 = vunpack.c.l.b16 %v756
          %v817 = vpack.c.b16 %v802, %v801
          %v818 = vpack.c.b16 %v804, %v803
          %v819 = vpack.c.b16 %v806, %v805
          %v820 = vpack.c.b16 %v808, %v807
          %v821 = vpack.c.b16 %v810, %v809
          %v822 = vpack.c.b16 %v812, %v811
          %v823 = vpack.c.b16 %v814, %v813
          %v824 = vpack.c.b16 %v816, %v815
          %v849 = vunpack.c.l.b16 %v757
          %v850 = vunpack.c.h.b16 %v757
          %v851 = vunpack.c.l.b16 %v758
          %v852 = vunpack.c.h.b16 %v758
          %v853 = vunpack.c.l.b16 %v759
          %v854 = vunpack.c.h.b16 %v759
          %v855 = vunpack.c.l.b16 %v760
          %v856 = vunpack.c.h.b16 %v760
          %v857 = vunpack.c.l.b16 %v761
          %v858 = vunpack.c.h.b16 %v761
          %v859 = vunpack.c.l.b16 %v762
          %v860 = vunpack.c.h.b16 %v762
          %v861 = vunpack.c.l.b16 %v763
          %v862 = vunpack.c.h.b16 %v763
          %v863 = vunpack.c.l.b16 %v764
          %v864 = vunpack.c.h.b16 %v764
          %v865 = vunpack.c.l.b16 %v765
          %v866 = vunpack.c.h.b16 %v765
          %v867 = vunpack.c.l.b16 %v766
          %v868 = vunpack.c.h.b16 %v766
          %v869 = vunpack.c.l.b16 %v767
          %v870 = vunpack.c.h.b16 %v767
          %v871 = vunpack.c.l.b16 %v768
          %v872 = vunpack.c.h.b16 %v768
          %v873 = vunpack.c.l.b16 %v769
          %v874 = vunpack.c.h.b16 %v769
          %v875 = vunpack.c.l.b16 %v770
          %v876 = vunpack.c.h.b16 %v770
          %v877 = vunpack.c.l.b16 %v771
          %v878 = vunpack.c.h.b16 %v771
          %v879 = vunpack.c.l.b16 %v772
          %v880 = vunpack.c.h.b16 %v772
          %v881 = vpack.c.b16 %v851, %v849
          %v882 = vpack.c.b16 %v852, %v850
          %v883 = vpack.c.b16 %v855, %v853
          %v884 = vpack.c.b16 %v856, %v854
          %v885 = vpack.c.b16 %v859, %v857
          %v886 = vpack.c.b16 %v860, %v858
          %v887 = vpack.c.b16 %v863, %v861
          %v888 = vpack.c.b16 %v864, %v862
          %v889 = vpack.c.b16 %v867, %v865
          %v890 = vpack.c.b16 %v868, %v866
          %v891 = vpack.c.b16 %v871, %v869
          %v892 = vpack.c.b16 %v872, %v870
          %v893 = vpack.c.b16 %v875, %v873
          %v894 = vpack.c.b16 %v876, %v874
          %v895 = vpack.c.b16 %v879, %v877
          %v896 = vpack.c.b16 %v880, %v878
          %913 = vmatprep.subr.bf16.mxu0 %v882
          %914 = vmatpush1.bf16.msra.mxu0 %v881
          %915 = vmatprep.subr.bf16.mxu0 %v884
          %916 = vmatpush1.bf16.msra.mxu0 %v883
          %917 = vmatprep.subr.bf16.mxu0 %v886
          %918 = vmatpush1.bf16.msra.mxu0 %v885
          %919 = vmatprep.subr.bf16.mxu0 %v888
          %920 = vmatpush1.bf16.msra.mxu0 %v887
          %921 = vmatprep.subr.bf16.mxu0 %v890
          %922 = vmatpush1.bf16.msra.mxu0 %v889
          %923 = vmatprep.subr.bf16.mxu0 %v892
          %924 = vmatpush1.bf16.msra.mxu0 %v891
          %925 = vmatprep.subr.bf16.mxu0 %v894
          %926 = vmatpush1.bf16.msra.mxu0 %v893
          %927 = vmatprep.subr.bf16.mxu0 %v896
          %928 = vmatpush1.bf16.msra.mxu0 %v895
          %929 = vmatprep.subr.bf16.mxu0 0
          %930 = vmatpush1.bf16.msra.mxu0 0
          %931 = vmatprep.subr.bf16.mxu0 0
          %932 = vmatpush1.bf16.msra.mxu0 0
          %933 = vmatprep.subr.bf16.mxu0 0
          %934 = vmatpush1.bf16.msra.mxu0 0
          %935 = vmatprep.subr.bf16.mxu0 0
          %936 = vmatpush1.bf16.msra.mxu0 0
          %937 = vmatprep.subr.bf16.mxu0 0
          %938 = vmatpush1.bf16.msra.mxu0 0
          %939 = vmatprep.subr.bf16.mxu0 0
          %940 = vmatpush1.bf16.msra.mxu0 0
          %941 = vmatprep.subr.bf16.mxu0 0
          %942 = vmatpush1.bf16.msra.mxu0 0
          %943 = vmatprep.subr.bf16.mxu0 0
          %944 = vmatpush1.bf16.msra.mxu0 0
          %945 = vmatprep.mubr.bf16.mxu0 0
          %946 = vmatmul.mubr.bf16.gmra.mrb[0].mxu0 %v817
          %v947 = vpop.f32.mrb[0].mxu0
          %v948 = vadd.f32 %v778, %v947
          %v949 = vpop.f32.mrb[0].mxu0
          %v950 = vadd.f32 %v782, %v949
          %v951 = vpop.f32.mrb[0].mxu0
          %v952 = vadd.f32 %v778, %v951
          %v953 = vpop.f32.mrb[0].mxu0
          %v954 = vadd.f32 %v782, %v953
          %955 = vmatprep.mubr.bf16.mxu0 0
          %956 = vmatmul.mubr.bf16.gmra.mrb[0].mxu0 %v818
          %v957 = vpop.f32.mrb[0].mxu0
          %v958 = vadd.f32 %v778, %v957
          %v959 = vpop.f32.mrb[0].mxu0
          %v960 = vadd.f32 %v782, %v959
          %v961 = vpop.f32.mrb[0].mxu0
          %v962 = vadd.f32 %v778, %v961
          %v963 = vpop.f32.mrb[0].mxu0
          %v964 = vadd.f32 %v782, %v963
          %965 = vmatprep.mubr.bf16.mxu0 0
          %966 = vmatmul.mubr.bf16.gmra.mrb[0].mxu0 %v819
          %v967 = vpop.f32.mrb[0].mxu0
          %v968 = vadd.f32 %v778, %v967
          %v969 = vpop.f32.mrb[0].mxu0
          %v970 = vadd.f32 %v782, %v969
          %v971 = vpop.f32.mrb[0].mxu0
          %v972 = vadd.f32 %v778, %v971
          %v973 = vpop.f32.mrb[0].mxu0
          %v974 = vadd.f32 %v782, %v973
          %975 = vmatprep.mubr.bf16.mxu0 0
          %976 = vmatmul.mubr.bf16.gmra.mrb[0].mxu0 %v820
          %v977 = vpop.f32.mrb[0].mxu0
          %v978 = vadd.f32 %v778, %v977
          %v979 = vpop.f32.mrb[0].mxu0
          %v980 = vadd.f32 %v782, %v979
          %v981 = vpop.f32.mrb[0].mxu0
          %v982 = vadd.f32 %v778, %v981
          %v983 = vpop.f32.mrb[0].mxu0
          %v984 = vadd.f32 %v782, %v983
          %985 = vmatprep.mubr.bf16.mxu0 0
          %986 = vmatmul.mubr.bf16.gmra.mrb[0].mxu0 %v821
          %v987 = vpop.f32.mrb[0].mxu0
          %v988 = vadd.f32 %v778, %v987
          %v989 = vpop.f32.mrb[0].mxu0
          %v990 = vadd.f32 %v782, %v989
          %v991 = vpop.f32.mrb[0].mxu0
          %v992 = vadd.f32 %v778, %v991
          %v993 = vpop.f32.mrb[0].mxu0
          %v994 = vadd.f32 %v782, %v993
          %995 = vmatprep.mubr.bf16.mxu0 0
          %996 = vmatmul.mubr.bf16.gmra.mrb[0].mxu0 %v822
          %v997 = vpop.f32.mrb[0].mxu0
          %v998 = vadd.f32 %v778, %v997
          %v999 = vpop.f32.mrb[0].mxu0
          %v1000 = vadd.f32 %v782, %v999
          %v1001 = vpop.f32.mrb[0].mxu0
          %v1002 = vadd.f32 %v778, %v1001
          %v1003 = vpop.f32.mrb[0].mxu0
          %v1004 = vadd.f32 %v782, %v1003
          %1005 = vmatprep.mubr.bf16.mxu0 0
          %1006 = vmatmul.mubr.bf16.gmra.mrb[0].mxu0 %v823
          %v1007 = vpop.f32.mrb[0].mxu0
          %v1008 = vadd.f32 %v778, %v1007
          %v1009 = vpop.f32.mrb[0].mxu0
          %v1010 = vadd.f32 %v782, %v1009
          %v1011 = vpop.f32.mrb[0].mxu0
          %v1012 = vadd.f32 %v778, %v1011
          %v1013 = vpop.f32.mrb[0].mxu0
          %v1014 = vadd.f32 %v782, %v1013
          %1015 = vmatprep.mubr.bf16.mxu0 0
          %1016 = vmatmul.mubr.bf16.gmra.mrb[0].mxu0 %v824
          %v1017 = vpop.f32.mrb[0].mxu0
          %v1018 = vadd.f32 %v778, %v1017
          %v1019 = vpop.f32.mrb[0].mxu0
          %v1020 = vadd.f32 %v782, %v1019
          %v1021 = vpop.f32.mrb[0].mxu0
          %v1022 = vadd.f32 %v778, %v1021
          %v1023 = vpop.f32.mrb[0].mxu0
          %v1024 = vadd.f32 %v782, %v1023
          %1025 = vdwg.mxu0
          %v1026 = vpack.c.bf16 %v952, %v948
          %v1027 = vpack.c.bf16 %v954, %v950
          %v1028 = vpack.c.bf16 %v962, %v958
          %v1029 = vpack.c.bf16 %v964, %v960
          %v1030 = vpack.c.bf16 %v972, %v968
          %v1031 = vpack.c.bf16 %v974, %v970
          %v1032 = vpack.c.bf16 %v982, %v978
          %v1033 = vpack.c.bf16 %v984, %v980
          %v1034 = vpack.c.bf16 %v992, %v988
          %v1035 = vpack.c.bf16 %v994, %v990
          %v1036 = vpack.c.bf16 %v1002, %v998
          %v1037 = vpack.c.bf16 %v1004, %v1000
          %v1038 = vpack.c.bf16 %v1012, %v1008
          %v1039 = vpack.c.bf16 %v1014, %v1010
          %v1040 = vpack.c.bf16 %v1022, %v1018
          %v1041 = vpack.c.bf16 %v1024, %v1020
          %1042 = vst [vmem:[#allocation2] sm:$0xff] %v1026
          %1043 = vst [vmem:[#allocation2 + $0x8] sm:$0xff] %v1027
          %1044 = vst [vmem:[#allocation2 + $0x10] sm:$0xff] %v1028
          %1045 = vst [vmem:[#allocation2 + $0x18] sm:$0xff] %v1029
          %1046 = vst [vmem:[#allocation2 + $0x20] sm:$0xff] %v1030
          %1047 = vst [vmem:[#allocation2 + $0x28] sm:$0xff] %v1031
          %1048 = vst [vmem:[#allocation2 + $0x30] sm:$0xff] %v1032
          %1049 = vst [vmem:[#allocation2 + $0x38] sm:$0xff] %v1033
          %1050 = vst [vmem:[#allocation2 + $0x40] sm:$0xff] %v1034
          %1051 = vst [vmem:[#allocation2 + $0x48] sm:$0xff] %v1035
          %1052 = vst [vmem:[#allocation2 + $0x50] sm:$0xff] %v1036
          %1053 = vst [vmem:[#allocation2 + $0x58] sm:$0xff] %v1037
          %1054 = vst [vmem:[#allocation2 + $0x60] sm:$0xff] %v1038
          %1055 = vst [vmem:[#allocation2 + $0x68] sm:$0xff] %v1039
          %1056 = vst [vmem:[#allocation2 + $0x70] sm:$0xff] %v1040
          %1057 = vst [vmem:[#allocation2 + $0x78] sm:$0xff] %v1041
          %v1058 = vld [vmem:[#allocation18] sm:$0xff]
          %v1059 = vld [vmem:[#allocation18 + $0x8] sm:$0xff]
          %v1060 = vld [vmem:[#allocation18 + $0x10] sm:$0xff]
          %v1061 = vld [vmem:[#allocation18 + $0x18] sm:$0xff]
          %v1062 = vld [vmem:[#allocation18 + $0x20] sm:$0xff]
          %v1063 = vld [vmem:[#allocation18 + $0x28] sm:$0xff]
          %v1064 = vld [vmem:[#allocation18 + $0x30] sm:$0xff]
          %v1065 = vld [vmem:[#allocation18 + $0x38] sm:$0xff]
          %v1066 = vld [vmem:[#allocation18 + $0x40] sm:$0xff]
          %v1067 = vld [vmem:[#allocation18 + $0x48] sm:$0xff]
          %v1068 = vld [vmem:[#allocation18 + $0x50] sm:$0xff]
          %v1069 = vld [vmem:[#allocation18 + $0x58] sm:$0xff]
          %v1070 = vld [vmem:[#allocation18 + $0x60] sm:$0xff]
          %v1071 = vld [vmem:[#allocation18 + $0x68] sm:$0xff]
          %v1072 = vld [vmem:[#allocation18 + $0x70] sm:$0xff]
          %v1073 = vld [vmem:[#allocation18 + $0x78] sm:$0xff]
          %v1074 = vld [vmem:[#allocation21] sm:$0x3]
          %v1076 = vlaneseq
          %v1077 = vshrl.u32 %v1076, 7
          %v1078 = vsub.s32 0, %v1077
          %v1079 = vrot.slane %v1074, %v1078
          %v1080 = vlaneseq
          %v1081 = vshrl.u32 %v1080, 7
          %v1082 = vsub.s32 1, %v1081
          %v1083 = vrot.slane %v1074, %v1082
          %v1102 = vunpack.c.l.b16 %v1058
          %v1103 = vunpack.c.h.b16 %v1058
          %v1104 = vunpack.c.l.b16 %v1059
          %v1105 = vunpack.c.h.b16 %v1059
          %v1106 = vunpack.c.l.b16 %v1060
          %v1107 = vunpack.c.h.b16 %v1060
          %v1108 = vunpack.c.l.b16 %v1061
          %v1109 = vunpack.c.h.b16 %v1061
          %v1110 = vunpack.c.l.b16 %v1062
          %v1111 = vunpack.c.h.b16 %v1062
          %v1112 = vunpack.c.l.b16 %v1063
          %v1113 = vunpack.c.h.b16 %v1063
          %v1114 = vunpack.c.l.b16 %v1064
          %v1115 = vunpack.c.h.b16 %v1064
          %v1116 = vunpack.c.l.b16 %v1065
          %v1117 = vunpack.c.h.b16 %v1065
          %v1118 = vunpack.c.l.b16 %v1066
          %v1119 = vunpack.c.h.b16 %v1066
          %v1120 = vunpack.c.l.b16 %v1067
          %v1121 = vunpack.c.h.b16 %v1067
          %v1122 = vunpack.c.l.b16 %v1068
          %v1123 = vunpack.c.h.b16 %v1068
          %v1124 = vunpack.c.l.b16 %v1069
          %v1125 = vunpack.c.h.b16 %v1069
          %v1126 = vunpack.c.l.b16 %v1070
          %v1127 = vunpack.c.h.b16 %v1070
          %v1128 = vunpack.c.l.b16 %v1071
          %v1129 = vunpack.c.h.b16 %v1071
          %v1130 = vunpack.c.l.b16 %v1072
          %v1131 = vunpack.c.h.b16 %v1072
          %v1132 = vunpack.c.l.b16 %v1073
          %v1133 = vunpack.c.h.b16 %v1073
          %v1134 = vpack.c.b16 %v1104, %v1102
          %v1135 = vpack.c.b16 %v1105, %v1103
          %v1136 = vpack.c.b16 %v1108, %v1106
          %v1137 = vpack.c.b16 %v1109, %v1107
          %v1138 = vpack.c.b16 %v1112, %v1110
          %v1139 = vpack.c.b16 %v1113, %v1111
          %v1140 = vpack.c.b16 %v1116, %v1114
          %v1141 = vpack.c.b16 %v1117, %v1115
          %v1142 = vpack.c.b16 %v1120, %v1118
          %v1143 = vpack.c.b16 %v1121, %v1119
          %v1144 = vpack.c.b16 %v1124, %v1122
          %v1145 = vpack.c.b16 %v1125, %v1123
          %v1146 = vpack.c.b16 %v1128, %v1126
          %v1147 = vpack.c.b16 %v1129, %v1127
          %v1148 = vpack.c.b16 %v1132, %v1130
          %v1149 = vpack.c.b16 %v1133, %v1131
          %1166 = vmatprep.subr.bf16.mxu0 %v1135
          %1167 = vmatpush1.bf16.msra.mxu0 %v1134
          %1168 = vmatprep.subr.bf16.mxu0 %v1137
          %1169 = vmatpush1.bf16.msra.mxu0 %v1136
          %1170 = vmatprep.subr.bf16.mxu0 %v1139
          %1171 = vmatpush1.bf16.msra.mxu0 %v1138
          %1172 = vmatprep.subr.bf16.mxu0 %v1141
          %1173 = vmatpush1.bf16.msra.mxu0 %v1140
          %1174 = vmatprep.subr.bf16.mxu0 %v1143
          %1175 = vmatpush1.bf16.msra.mxu0 %v1142
          %1176 = vmatprep.subr.bf16.mxu0 %v1145
          %1177 = vmatpush1.bf16.msra.mxu0 %v1144
          %1178 = vmatprep.subr.bf16.mxu0 %v1147
          %1179 = vmatpush1.bf16.msra.mxu0 %v1146
          %1180 = vmatprep.subr.bf16.mxu0 %v1149
          %1181 = vmatpush1.bf16.msra.mxu0 %v1148
          %1182 = vmatprep.subr.bf16.mxu0 0
          %1183 = vmatpush1.bf16.msra.mxu0 0
          %1184 = vmatprep.subr.bf16.mxu0 0
          %1185 = vmatpush1.bf16.msra.mxu0 0
          %1186 = vmatprep.subr.bf16.mxu0 0
          %1187 = vmatpush1.bf16.msra.mxu0 0
          %1188 = vmatprep.subr.bf16.mxu0 0
          %1189 = vmatpush1.bf16.msra.mxu0 0
          %1190 = vmatprep.subr.bf16.mxu0 0
          %1191 = vmatpush1.bf16.msra.mxu0 0
          %1192 = vmatprep.subr.bf16.mxu0 0
          %1193 = vmatpush1.bf16.msra.mxu0 0
          %1194 = vmatprep.subr.bf16.mxu0 0
          %1195 = vmatpush1.bf16.msra.mxu0 0
          %1196 = vmatprep.subr.bf16.mxu0 0
          %1197 = vmatpush1.bf16.msra.mxu0 0
          %1198 = vmatprep.mubr.bf16.mxu0 0
          %1199 = vmatmul.mubr.bf16.gmra.mrb[0].mxu0 %v817
          %v1200 = vpop.f32.mrb[0].mxu0
          %v1201 = vadd.f32 %v1079, %v1200
          %v1202 = vpop.f32.mrb[0].mxu0
          %v1203 = vadd.f32 %v1083, %v1202
          %v1204 = vpop.f32.mrb[0].mxu0
          %v1205 = vadd.f32 %v1079, %v1204
          %v1206 = vpop.f32.mrb[0].mxu0
          %v1207 = vadd.f32 %v1083, %v1206
          %1208 = vmatprep.mubr.bf16.mxu0 0
          %1209 = vmatmul.mubr.bf16.gmra.mrb[0].mxu0 %v818
          %v1210 = vpop.f32.mrb[0].mxu0
          %v1211 = vadd.f32 %v1079, %v1210
          %v1212 = vpop.f32.mrb[0].mxu0
          %v1213 = vadd.f32 %v1083, %v1212
          %v1214 = vpop.f32.mrb[0].mxu0
          %v1215 = vadd.f32 %v1079, %v1214
          %v1216 = vpop.f32.mrb[0].mxu0
          %v1217 = vadd.f32 %v1083, %v1216
          %1218 = vmatprep.mubr.bf16.mxu0 0
          %1219 = vmatmul.mubr.bf16.gmra.mrb[0].mxu0 %v819
          %v1220 = vpop.f32.mrb[0].mxu0
          %v1221 = vadd.f32 %v1079, %v1220
          %v1222 = vpop.f32.mrb[0].mxu0
          %v1223 = vadd.f32 %v1083, %v1222
          %v1224 = vpop.f32.mrb[0].mxu0
          %v1225 = vadd.f32 %v1079, %v1224
          %v1226 = vpop.f32.mrb[0].mxu0
          %v1227 = vadd.f32 %v1083, %v1226
          %1228 = vmatprep.mubr.bf16.mxu0 0
          %1229 = vmatmul.mubr.bf16.gmra.mrb[0].mxu0 %v820
          %v1230 = vpop.f32.mrb[0].mxu0
          %v1231 = vadd.f32 %v1079, %v1230
          %v1232 = vpop.f32.mrb[0].mxu0
          %v1233 = vadd.f32 %v1083, %v1232
          %v1234 = vpop.f32.mrb[0].mxu0
          %v1235 = vadd.f32 %v1079, %v1234
          %v1236 = vpop.f32.mrb[0].mxu0
          %v1237 = vadd.f32 %v1083, %v1236
          %1238 = vmatprep.mubr.bf16.mxu0 0
          %1239 = vmatmul.mubr.bf16.gmra.mrb[0].mxu0 %v821
          %v1240 = vpop.f32.mrb[0].mxu0
          %v1241 = vadd.f32 %v1079, %v1240
          %v1242 = vpop.f32.mrb[0].mxu0
          %v1243 = vadd.f32 %v1083, %v1242
          %v1244 = vpop.f32.mrb[0].mxu0
          %v1245 = vadd.f32 %v1079, %v1244
          %v1246 = vpop.f32.mrb[0].mxu0
          %v1247 = vadd.f32 %v1083, %v1246
          %1248 = vmatprep.mubr.bf16.mxu0 0
          %1249 = vmatmul.mubr.bf16.gmra.mrb[0].mxu0 %v822
          %v1250 = vpop.f32.mrb[0].mxu0
          %v1251 = vadd.f32 %v1079, %v1250
          %v1252 = vpop.f32.mrb[0].mxu0
          %v1253 = vadd.f32 %v1083, %v1252
          %v1254 = vpop.f32.mrb[0].mxu0
          %v1255 = vadd.f32 %v1079, %v1254
          %v1256 = vpop.f32.mrb[0].mxu0
          %v1257 = vadd.f32 %v1083, %v1256
          %1258 = vmatprep.mubr.bf16.mxu0 0
          %1259 = vmatmul.mubr.bf16.gmra.mrb[0].mxu0 %v823
          %v1260 = vpop.f32.mrb[0].mxu0
          %v1261 = vadd.f32 %v1079, %v1260
          %v1262 = vpop.f32.mrb[0].mxu0
          %v1263 = vadd.f32 %v1083, %v1262
          %v1264 = vpop.f32.mrb[0].mxu0
          %v1265 = vadd.f32 %v1079, %v1264
          %v1266 = vpop.f32.mrb[0].mxu0
          %v1267 = vadd.f32 %v1083, %v1266
          %1268 = vmatprep.mubr.bf16.mxu0 0
          %1269 = vmatmul.mubr.bf16.gmra.mrb[0].mxu0 %v824
          %v1270 = vpop.f32.mrb[0].mxu0
          %v1271 = vadd.f32 %v1079, %v1270
          %v1272 = vpop.f32.mrb[0].mxu0
          %v1273 = vadd.f32 %v1083, %v1272
          %v1274 = vpop.f32.mrb[0].mxu0
          %v1275 = vadd.f32 %v1079, %v1274
          %v1276 = vpop.f32.mrb[0].mxu0
          %v1277 = vadd.f32 %v1083, %v1276
          %1278 = vdwg.mxu0
          %v1279 = vpack.c.bf16 %v1205, %v1201
          %v1280 = vpack.c.bf16 %v1207, %v1203
          %v1281 = vpack.c.bf16 %v1215, %v1211
          %v1282 = vpack.c.bf16 %v1217, %v1213
          %v1283 = vpack.c.bf16 %v1225, %v1221
          %v1284 = vpack.c.bf16 %v1227, %v1223
          %v1285 = vpack.c.bf16 %v1235, %v1231
          %v1286 = vpack.c.bf16 %v1237, %v1233
          %v1287 = vpack.c.bf16 %v1245, %v1241
          %v1288 = vpack.c.bf16 %v1247, %v1243
          %v1289 = vpack.c.bf16 %v1255, %v1251
          %v1290 = vpack.c.bf16 %v1257, %v1253
          %v1291 = vpack.c.bf16 %v1265, %v1261
          %v1292 = vpack.c.bf16 %v1267, %v1263
          %v1293 = vpack.c.bf16 %v1275, %v1271
          %v1294 = vpack.c.bf16 %v1277, %v1273
          %1295 = vst [vmem:[#allocation3] sm:$0xff] %v1279
          %1296 = vst [vmem:[#allocation3 + $0x8] sm:$0xff] %v1280
          %1297 = vst [vmem:[#allocation3 + $0x10] sm:$0xff] %v1281
          %1298 = vst [vmem:[#allocation3 + $0x18] sm:$0xff] %v1282
          %1299 = vst [vmem:[#allocation3 + $0x20] sm:$0xff] %v1283
          %1300 = vst [vmem:[#allocation3 + $0x28] sm:$0xff] %v1284
          %1301 = vst [vmem:[#allocation3 + $0x30] sm:$0xff] %v1285
          %1302 = vst [vmem:[#allocation3 + $0x38] sm:$0xff] %v1286
          %1303 = vst [vmem:[#allocation3 + $0x40] sm:$0xff] %v1287
          %1304 = vst [vmem:[#allocation3 + $0x48] sm:$0xff] %v1288
          %1305 = vst [vmem:[#allocation3 + $0x50] sm:$0xff] %v1289
          %1306 = vst [vmem:[#allocation3 + $0x58] sm:$0xff] %v1290
          %1307 = vst [vmem:[#allocation3 + $0x60] sm:$0xff] %v1291
          %1308 = vst [vmem:[#allocation3 + $0x68] sm:$0xff] %v1292
          %1309 = vst [vmem:[#allocation3 + $0x70] sm:$0xff] %v1293
          %1310 = vst [vmem:[#allocation3 + $0x78] sm:$0xff] %v1294
        $region136: #{tpu_custom_call.1} parent=75 // pred_fallthru
          _
        %v1311 = vld [vmem:[%s626] sm:$0xff]
        %v1312 = vld [vmem:[%s626 + $0x8] sm:$0xff]
        %v1313 = vld [vmem:[%s626 + $0x10] sm:$0xff]
        %v1314 = vld [vmem:[%s626 + $0x18] sm:$0xff]
        %v1315 = vld [vmem:[%s626 + $0x20] sm:$0xff]
        %v1316 = vld [vmem:[%s626 + $0x28] sm:$0xff]
        %v1317 = vld [vmem:[%s626 + $0x30] sm:$0xff]
        %v1318 = vld [vmem:[%s626 + $0x38] sm:$0xff]
        %v1319 = vld [vmem:[%s626 + $0x40] sm:$0xff]
        %v1320 = vld [vmem:[%s626 + $0x48] sm:$0xff]
        %v1321 = vld [vmem:[%s626 + $0x50] sm:$0xff]
        %v1322 = vld [vmem:[%s626 + $0x58] sm:$0xff]
        %v1323 = vld [vmem:[%s626 + $0x60] sm:$0xff]
        %v1324 = vld [vmem:[%s626 + $0x68] sm:$0xff]
        %v1325 = vld [vmem:[%s626 + $0x70] sm:$0xff]
        %v1326 = vld [vmem:[%s626 + $0x78] sm:$0xff]
        %v1327 = vpack.c.bf16 %v1312, %v1311
        %v1328 = vpack.c.bf16 %v1314, %v1313
        %v1329 = vpack.c.bf16 %v1316, %v1315
        %v1330 = vpack.c.bf16 %v1318, %v1317
        %v1331 = vpack.c.bf16 %v1320, %v1319
        %v1332 = vpack.c.bf16 %v1322, %v1321
        %v1333 = vpack.c.bf16 %v1324, %v1323
        %v1334 = vpack.c.bf16 %v1326, %v1325
        %v1335 = vld [vmem:[%s635] sm:$0xff]
        %v1336 = vld [vmem:[%s635 + $0x8] sm:$0xff]
        %v1337 = vld [vmem:[%s635 + $0x10] sm:$0xff]
        %v1338 = vld [vmem:[%s635 + $0x18] sm:$0xff]
        %v1339 = vld [vmem:[%s635 + $0x20] sm:$0xff]
        %v1340 = vld [vmem:[%s635 + $0x28] sm:$0xff]
        %v1341 = vld [vmem:[%s635 + $0x30] sm:$0xff]
        %v1342 = vld [vmem:[%s635 + $0x38] sm:$0xff]
        %v1343 = vld [vmem:[%s635 + $0x40] sm:$0xff]
        %v1344 = vld [vmem:[%s635 + $0x48] sm:$0xff]
        %v1345 = vld [vmem:[%s635 + $0x50] sm:$0xff]
        %v1346 = vld [vmem:[%s635 + $0x58] sm:$0xff]
        %v1347 = vld [vmem:[%s635 + $0x60] sm:$0xff]
        %v1348 = vld [vmem:[%s635 + $0x68] sm:$0xff]
        %v1349 = vld [vmem:[%s635 + $0x70] sm:$0xff]
        %v1350 = vld [vmem:[%s635 + $0x78] sm:$0xff]
        %v1351 = vpack.c.bf16 %v1336, %v1335
        %v1352 = vpack.c.bf16 %v1338, %v1337
        %v1353 = vpack.c.bf16 %v1340, %v1339
        %v1354 = vpack.c.bf16 %v1342, %v1341
        %v1355 = vpack.c.bf16 %v1344, %v1343
        %v1356 = vpack.c.bf16 %v1346, %v1345
        %v1357 = vpack.c.bf16 %v1348, %v1347
        %v1358 = vpack.c.bf16 %v1350, %v1349
        %v1359 = vld [vmem:[#allocation2] sm:$0xff]
        %v1360 = vld [vmem:[#allocation2 + $0x8] sm:$0xff]
        %v1361 = vld [vmem:[#allocation2 + $0x10] sm:$0xff]
        %v1362 = vld [vmem:[#allocation2 + $0x18] sm:$0xff]
        %v1363 = vld [vmem:[#allocation2 + $0x20] sm:$0xff]
        %v1364 = vld [vmem:[#allocation2 + $0x28] sm:$0xff]
        %v1365 = vld [vmem:[#allocation2 + $0x30] sm:$0xff]
        %v1366 = vld [vmem:[#allocation2 + $0x38] sm:$0xff]
        %v1367 = vld [vmem:[#allocation2 + $0x40] sm:$0xff]
        %v1368 = vld [vmem:[#allocation2 + $0x48] sm:$0xff]
        %v1369 = vld [vmem:[#allocation2 + $0x50] sm:$0xff]
        %v1370 = vld [vmem:[#allocation2 + $0x58] sm:$0xff]
        %v1371 = vld [vmem:[#allocation2 + $0x60] sm:$0xff]
        %v1372 = vld [vmem:[#allocation2 + $0x68] sm:$0xff]
        %v1373 = vld [vmem:[#allocation2 + $0x70] sm:$0xff]
        %v1374 = vld [vmem:[#allocation2 + $0x78] sm:$0xff]
        %1375 = vmatprep.subr.bf16.mxu0 %v1360
        %1376 = vmatpush1.bf16.msra.mxu0 %v1359
        %1377 = vmatprep.subr.bf16.mxu0 %v1362
        %1378 = vmatpush1.bf16.msra.mxu0 %v1361
        %1379 = vmatprep.subr.bf16.mxu0 %v1364
        %1380 = vmatpush1.bf16.msra.mxu0 %v1363
        %1381 = vmatprep.subr.bf16.mxu0 %v1366
        %1382 = vmatpush1.bf16.msra.mxu0 %v1365
        %1383 = vmatprep.subr.bf16.mxu0 %v1368
        %1384 = vmatpush1.bf16.msra.mxu0 %v1367
        %1385 = vmatprep.subr.bf16.mxu0 %v1370
        %1386 = vmatpush1.bf16.msra.mxu0 %v1369
        %1387 = vmatprep.subr.bf16.mxu0 %v1372
        %1388 = vmatpush1.bf16.msra.mxu0 %v1371
        %1389 = vmatprep.subr.bf16.mxu0 %v1374
        %1390 = vmatpush1.bf16.msra.mxu0 %v1373
        %1391 = vmatprep.subr.bf16.mxu0 0
        %1392 = vmatpush1.bf16.msra.mxu0 0
        %1393 = vmatprep.subr.bf16.mxu0 0
        %1394 = vmatpush1.bf16.msra.mxu0 0
        %1395 = vmatprep.subr.bf16.mxu0 0
        %1396 = vmatpush1.bf16.msra.mxu0 0
        %1397 = vmatprep.subr.bf16.mxu0 0
        %1398 = vmatpush1.bf16.msra.mxu0 0
        %1399 = vmatprep.subr.bf16.mxu0 0
        %1400 = vmatpush1.bf16.msra.mxu0 0
        %1401 = vmatprep.subr.bf16.mxu0 0
        %1402 = vmatpush1.bf16.msra.mxu0 0
        %1403 = vmatprep.subr.bf16.mxu0 0
        %1404 = vmatpush1.bf16.msra.mxu0 0
        %1405 = vmatprep.subr.bf16.mxu0 0
        %1406 = vmatpush1.bf16.msra.mxu0 0
        %1407 = vmatprep.mubr.bf16.mxu0 0
        %1408 = vmatmul.mubr.bf16.gmra.mrb[0].mxu0 %v1327
        %v1409 = vpop.f32.mrb[0].mxu0
        %v1410 = vadd.f32 0.0, %v1409
        %v1411 = vpop.f32.mrb[0].mxu0
        %v1412 = vadd.f32 0.0, %v1411
        %v1413 = vpop.f32.mrb[0].mxu0
        %v1414 = vadd.f32 0.0, %v1413
        %v1415 = vpop.f32.mrb[0].mxu0
        %v1416 = vadd.f32 0.0, %v1415
        %1417 = vmatprep.mubr.bf16.mxu0 0
        %1418 = vmatmul.mubr.bf16.gmra.mrb[0].mxu0 %v1328
        %v1419 = vpop.f32.mrb[0].mxu0
        %v1420 = vadd.f32 0.0, %v1419
        %v1421 = vpop.f32.mrb[0].mxu0
        %v1422 = vadd.f32 0.0, %v1421
        %v1423 = vpop.f32.mrb[0].mxu0
        %v1424 = vadd.f32 0.0, %v1423
        %v1425 = vpop.f32.mrb[0].mxu0
        %v1426 = vadd.f32 0.0, %v1425
        %1427 = vmatprep.mubr.bf16.mxu0 0
        %1428 = vmatmul.mubr.bf16.gmra.mrb[0].mxu0 %v1329
        %v1429 = vpop.f32.mrb[0].mxu0
        %v1430 = vadd.f32 0.0, %v1429
        %v1431 = vpop.f32.mrb[0].mxu0
        %v1432 = vadd.f32 0.0, %v1431
        %v1433 = vpop.f32.mrb[0].mxu0
        %v1434 = vadd.f32 0.0, %v1433
        %v1435 = vpop.f32.mrb[0].mxu0
        %v1436 = vadd.f32 0.0, %v1435
        %1437 = vmatprep.mubr.bf16.mxu0 0
        %1438 = vmatmul.mubr.bf16.gmra.mrb[0].mxu0 %v1330
        %v1439 = vpop.f32.mrb[0].mxu0
        %v1440 = vadd.f32 0.0, %v1439
        %v1441 = vpop.f32.mrb[0].mxu0
        %v1442 = vadd.f32 0.0, %v1441
        %v1443 = vpop.f32.mrb[0].mxu0
        %v1444 = vadd.f32 0.0, %v1443
        %v1445 = vpop.f32.mrb[0].mxu0
        %v1446 = vadd.f32 0.0, %v1445
        %1447 = vmatprep.mubr.bf16.mxu0 0
        %1448 = vmatmul.mubr.bf16.gmra.mrb[0].mxu0 %v1331
        %v1449 = vpop.f32.mrb[0].mxu0
        %v1450 = vadd.f32 0.0, %v1449
        %v1451 = vpop.f32.mrb[0].mxu0
        %v1452 = vadd.f32 0.0, %v1451
        %v1453 = vpop.f32.mrb[0].mxu0
        %v1454 = vadd.f32 0.0, %v1453
        %v1455 = vpop.f32.mrb[0].mxu0
        %v1456 = vadd.f32 0.0, %v1455
        %1457 = vmatprep.mubr.bf16.mxu0 0
        %1458 = vmatmul.mubr.bf16.gmra.mrb[0].mxu0 %v1332
        %v1459 = vpop.f32.mrb[0].mxu0
        %v1460 = vadd.f32 0.0, %v1459
        %v1461 = vpop.f32.mrb[0].mxu0
        %v1462 = vadd.f32 0.0, %v1461
        %v1463 = vpop.f32.mrb[0].mxu0
        %v1464 = vadd.f32 0.0, %v1463
        %v1465 = vpop.f32.mrb[0].mxu0
        %v1466 = vadd.f32 0.0, %v1465
        %1467 = vmatprep.mubr.bf16.mxu0 0
        %1468 = vmatmul.mubr.bf16.gmra.mrb[0].mxu0 %v1333
        %v1469 = vpop.f32.mrb[0].mxu0
        %v1470 = vadd.f32 0.0, %v1469
        %v1471 = vpop.f32.mrb[0].mxu0
        %v1472 = vadd.f32 0.0, %v1471
        %v1473 = vpop.f32.mrb[0].mxu0
        %v1474 = vadd.f32 0.0, %v1473
        %v1475 = vpop.f32.mrb[0].mxu0
        %v1476 = vadd.f32 0.0, %v1475
        %1477 = vmatprep.mubr.bf16.mxu0 0
        %1478 = vmatmul.mubr.bf16.gmra.mrb[0].mxu0 %v1334
        %v1479 = vpop.f32.mrb[0].mxu0
        %v1480 = vadd.f32 0.0, %v1479
        %v1481 = vpop.f32.mrb[0].mxu0
        %v1482 = vadd.f32 0.0, %v1481
        %v1483 = vpop.f32.mrb[0].mxu0
        %v1484 = vadd.f32 0.0, %v1483
        %v1485 = vpop.f32.mrb[0].mxu0
        %v1486 = vadd.f32 0.0, %v1485
        %1487 = vdwg.mxu0
        %v1488 = vld [vmem:[#allocation3] sm:$0xff]
        %v1489 = vld [vmem:[#allocation3 + $0x8] sm:$0xff]
        %v1490 = vld [vmem:[#allocation3 + $0x10] sm:$0xff]
        %v1491 = vld [vmem:[#allocation3 + $0x18] sm:$0xff]
        %v1492 = vld [vmem:[#allocation3 + $0x20] sm:$0xff]
        %v1493 = vld [vmem:[#allocation3 + $0x28] sm:$0xff]
        %v1494 = vld [vmem:[#allocation3 + $0x30] sm:$0xff]
        %v1495 = vld [vmem:[#allocation3 + $0x38] sm:$0xff]
        %v1496 = vld [vmem:[#allocation3 + $0x40] sm:$0xff]
        %v1497 = vld [vmem:[#allocation3 + $0x48] sm:$0xff]
        %v1498 = vld [vmem:[#allocation3 + $0x50] sm:$0xff]
        %v1499 = vld [vmem:[#allocation3 + $0x58] sm:$0xff]
        %v1500 = vld [vmem:[#allocation3 + $0x60] sm:$0xff]
        %v1501 = vld [vmem:[#allocation3 + $0x68] sm:$0xff]
        %v1502 = vld [vmem:[#allocation3 + $0x70] sm:$0xff]
        %v1503 = vld [vmem:[#allocation3 + $0x78] sm:$0xff]
        %1504 = vxpose.xlu0.c.b16.start [1/8] %v1351, 128
        %1505 = vxpose.xlu0.c.b16.cont [2/8] %v1352, 128
        %1506 = vxpose.xlu0.c.b16.cont [3/8] %v1353, 128
        %1507 = vxpose.xlu0.c.b16.cont [4/8] %v1354, 128
        %1508 = vxpose.xlu0.c.b16.cont [5/8] %v1355, 128
        %1509 = vxpose.xlu0.c.b16.cont [6/8] %v1356, 128
        %1510 = vxpose.xlu0.c.b16.cont [7/8] %v1357, 128
        %1511 = vxpose.xlu0.c.b16.end [8/8] %v1358, 128
        %v1512 = vpop.trf.xlu0
        %v1513 = vpop.trf.xlu0
        %v1514 = vpop.trf.xlu0
        %v1515 = vpop.trf.xlu0
        %v1516 = vpop.trf.xlu0
        %v1517 = vpop.trf.xlu0
        %v1518 = vpop.trf.xlu0
        %v1519 = vpop.trf.xlu0
        %1520 = vmatprep.subr.bf16.mxu0 %v1489
        %1521 = vmatpush1.bf16.msra.mxu0 %v1488
        %1522 = vmatprep.subr.bf16.mxu0 %v1491
        %1523 = vmatpush1.bf16.msra.mxu0 %v1490
        %1524 = vmatprep.subr.bf16.mxu0 %v1493
        %1525 = vmatpush1.bf16.msra.mxu0 %v1492
        %1526 = vmatprep.subr.bf16.mxu0 %v1495
        %1527 = vmatpush1.bf16.msra.mxu0 %v1494
        %1528 = vmatprep.subr.bf16.mxu0 %v1497
        %1529 = vmatpush1.bf16.msra.mxu0 %v1496
        %1530 = vmatprep.subr.bf16.mxu0 %v1499
        %1531 = vmatpush1.bf16.msra.mxu0 %v1498
        %1532 = vmatprep.subr.bf16.mxu0 %v1501
        %1533 = vmatpush1.bf16.msra.mxu0 %v1500
        %1534 = vmatprep.subr.bf16.mxu0 %v1503
        %1535 = vmatpush1.bf16.msra.mxu0 %v1502
        %1536 = vmatprep.subr.bf16.mxu0 0
        %1537 = vmatpush1.bf16.msra.mxu0 0
        %1538 = vmatprep.subr.bf16.mxu0 0
        %1539 = vmatpush1.bf16.msra.mxu0 0
        %1540 = vmatprep.subr.bf16.mxu0 0
        %1541 = vmatpush1.bf16.msra.mxu0 0
        %1542 = vmatprep.subr.bf16.mxu0 0
        %1543 = vmatpush1.bf16.msra.mxu0 0
        %1544 = vmatprep.subr.bf16.mxu0 0
        %1545 = vmatpush1.bf16.msra.mxu0 0
        %1546 = vmatprep.subr.bf16.mxu0 0
        %1547 = vmatpush1.bf16.msra.mxu0 0
        %1548 = vmatprep.subr.bf16.mxu0 0
        %1549 = vmatpush1.bf16.msra.mxu0 0
        %1550 = vmatprep.subr.bf16.mxu0 0
        %1551 = vmatpush1.bf16.msra.mxu0 0
        %1552 = vmatprep.mubr.bf16.mxu0 0
        %1553 = vmatmul.mubr.bf16.gmra.mrb[0].mxu0 %v1512
        %v1554 = vpop.f32.mrb[0].mxu0
        %v1555 = vadd.f32 0.0, %v1554
        %v1556 = vpop.f32.mrb[0].mxu0
        %v1557 = vadd.f32 0.0, %v1556
        %v1558 = vpop.f32.mrb[0].mxu0
        %v1559 = vadd.f32 0.0, %v1558
        %v1560 = vpop.f32.mrb[0].mxu0
        %v1561 = vadd.f32 0.0, %v1560
        %1562 = vmatprep.mubr.bf16.mxu0 0
        %1563 = vmatmul.mubr.bf16.gmra.mrb[0].mxu0 %v1513
        %v1564 = vpop.f32.mrb[0].mxu0
        %v1565 = vadd.f32 0.0, %v1564
        %v1566 = vpop.f32.mrb[0].mxu0
        %v1567 = vadd.f32 0.0, %v1566
        %v1568 = vpop.f32.mrb[0].mxu0
        %v1569 = vadd.f32 0.0, %v1568
        %v1570 = vpop.f32.mrb[0].mxu0
        %v1571 = vadd.f32 0.0, %v1570
        %1572 = vmatprep.mubr.bf16.mxu0 0
        %1573 = vmatmul.mubr.bf16.gmra.mrb[0].mxu0 %v1514
        %v1574 = vpop.f32.mrb[0].mxu0
        %v1575 = vadd.f32 0.0, %v1574
        %v1576 = vpop.f32.mrb[0].mxu0
        %v1577 = vadd.f32 0.0, %v1576
        %v1578 = vpop.f32.mrb[0].mxu0
        %v1579 = vadd.f32 0.0, %v1578
        %v1580 = vpop.f32.mrb[0].mxu0
        %v1581 = vadd.f32 0.0, %v1580
        %1582 = vmatprep.mubr.bf16.mxu0 0
        %1583 = vmatmul.mubr.bf16.gmra.mrb[0].mxu0 %v1515
        %v1584 = vpop.f32.mrb[0].mxu0
        %v1585 = vadd.f32 0.0, %v1584
        %v1586 = vpop.f32.mrb[0].mxu0
        %v1587 = vadd.f32 0.0, %v1586
        %v1588 = vpop.f32.mrb[0].mxu0
        %v1589 = vadd.f32 0.0, %v1588
        %v1590 = vpop.f32.mrb[0].mxu0
        %v1591 = vadd.f32 0.0, %v1590
        %1592 = vmatprep.mubr.bf16.mxu0 0
        %1593 = vmatmul.mubr.bf16.gmra.mrb[0].mxu0 %v1516
        %v1594 = vpop.f32.mrb[0].mxu0
        %v1595 = vadd.f32 0.0, %v1594
        %v1596 = vpop.f32.mrb[0].mxu0
        %v1597 = vadd.f32 0.0, %v1596
        %v1598 = vpop.f32.mrb[0].mxu0
        %v1599 = vadd.f32 0.0, %v1598
        %v1600 = vpop.f32.mrb[0].mxu0
        %v1601 = vadd.f32 0.0, %v1600
        %1602 = vmatprep.mubr.bf16.mxu0 0
        %1603 = vmatmul.mubr.bf16.gmra.mrb[0].mxu0 %v1517
        %v1604 = vpop.f32.mrb[0].mxu0
        %v1605 = vadd.f32 0.0, %v1604
        %v1606 = vpop.f32.mrb[0].mxu0
        %v1607 = vadd.f32 0.0, %v1606
        %v1608 = vpop.f32.mrb[0].mxu0
        %v1609 = vadd.f32 0.0, %v1608
        %v1610 = vpop.f32.mrb[0].mxu0
        %v1611 = vadd.f32 0.0, %v1610
        %1612 = vmatprep.mubr.bf16.mxu0 0
        %1613 = vmatmul.mubr.bf16.gmra.mrb[0].mxu0 %v1518
        %v1614 = vpop.f32.mrb[0].mxu0
        %v1615 = vadd.f32 0.0, %v1614
        %v1616 = vpop.f32.mrb[0].mxu0
        %v1617 = vadd.f32 0.0, %v1616
        %v1618 = vpop.f32.mrb[0].mxu0
        %v1619 = vadd.f32 0.0, %v1618
        %v1620 = vpop.f32.mrb[0].mxu0
        %v1621 = vadd.f32 0.0, %v1620
        %1622 = vmatprep.mubr.bf16.mxu0 0
        %1623 = vmatmul.mubr.bf16.gmra.mrb[0].mxu0 %v1519
        %v1624 = vpop.f32.mrb[0].mxu0
        %v1625 = vadd.f32 0.0, %v1624
        %v1626 = vpop.f32.mrb[0].mxu0
        %v1627 = vadd.f32 0.0, %v1626
        %v1628 = vpop.f32.mrb[0].mxu0
        %v1629 = vadd.f32 0.0, %v1628
        %v1630 = vpop.f32.mrb[0].mxu0
        %v1631 = vadd.f32 0.0, %v1630
        %1632 = vdwg.mxu0
        %s1633 = smul.u32 %s45, 128
        %s1634 = sshra.s32 %s1633, 3
        %s1635 = sand.u32 %s1633, 7
        %s1636 = smul.addr %s1634, 4
        %s1637 = scalar_lea.vmem %s617, %s1636 [#allocation4]
        %v1638 = vld [vmem:[%s1637] sm:$0xf]
        %v1639 = vld [vmem:[%s1637 + $0x4] sm:$0xf]
        %v1640 = vld [vmem:[%s1637 + $0x8] sm:$0xf]
        %v1641 = vld [vmem:[%s1637 + $0xc] sm:$0xf]
        %v1642 = vld [vmem:[%s1637 + $0x10] sm:$0xf]
        %v1643 = vld [vmem:[%s1637 + $0x14] sm:$0xf]
        %v1644 = vld [vmem:[%s1637 + $0x18] sm:$0xf]
        %v1645 = vld [vmem:[%s1637 + $0x1c] sm:$0xf]
        %v1646 = vld [vmem:[%s1637 + $0x20] sm:$0xf]
        %v1647 = vld [vmem:[%s1637 + $0x24] sm:$0xf]
        %v1648 = vld [vmem:[%s1637 + $0x28] sm:$0xf]
        %v1649 = vld [vmem:[%s1637 + $0x2c] sm:$0xf]
        %v1650 = vld [vmem:[%s1637 + $0x30] sm:$0xf]
        %v1651 = vld [vmem:[%s1637 + $0x34] sm:$0xf]
        %v1652 = vld [vmem:[%s1637 + $0x38] sm:$0xf]
        %v1653 = vld [vmem:[%s1637 + $0x3c] sm:$0xf]
        %v1654 = vld [vmem:[#allocation10] sm:$0xff]
        %v1655 = vld [vmem:[#allocation10 + $0x8] sm:$0xff]
        %v1656 = vld [vmem:[#allocation10 + $0x10] sm:$0xff]
        %v1657 = vld [vmem:[#allocation10 + $0x18] sm:$0xff]
        %v1658 = vld [vmem:[#allocation10 + $0x20] sm:$0xff]
        %v1659 = vld [vmem:[#allocation10 + $0x28] sm:$0xff]
        %v1660 = vld [vmem:[#allocation10 + $0x30] sm:$0xff]
        %v1661 = vld [vmem:[#allocation10 + $0x38] sm:$0xff]
        %v1662 = vld [vmem:[#allocation10 + $0x40] sm:$0xff]
        %v1663 = vld [vmem:[#allocation10 + $0x48] sm:$0xff]
        %v1664 = vld [vmem:[#allocation10 + $0x50] sm:$0xff]
        %v1665 = vld [vmem:[#allocation10 + $0x58] sm:$0xff]
        %v1666 = vld [vmem:[#allocation10 + $0x60] sm:$0xff]
        %v1667 = vld [vmem:[#allocation10 + $0x68] sm:$0xff]
        %v1668 = vld [vmem:[#allocation10 + $0x70] sm:$0xff]
        %v1669 = vld [vmem:[#allocation10 + $0x78] sm:$0xff]
        %v1670 = vld [vmem:[#allocation13] sm:$0x3]
        %v1672 = vlaneseq
        %v1673 = vshrl.u32 %v1672, 7
        %v1674 = vsub.s32 0, %v1673
        %v1675 = vrot.slane %v1670, %v1674
        %v1676 = vlaneseq
        %v1677 = vshrl.u32 %v1676, 7
        %v1678 = vsub.s32 1, %v1677
        %v1679 = vrot.slane %v1670, %v1678
        %v1698 = vunpack.c.l.b16 %v1638
        %v1699 = vunpack.c.l.b16 %v1639
        %v1700 = vunpack.c.l.b16 %v1640
        %v1701 = vunpack.c.l.b16 %v1641
        %v1702 = vunpack.c.l.b16 %v1642
        %v1703 = vunpack.c.l.b16 %v1643
        %v1704 = vunpack.c.l.b16 %v1644
        %v1705 = vunpack.c.l.b16 %v1645
        %v1706 = vunpack.c.l.b16 %v1646
        %v1707 = vunpack.c.l.b16 %v1647
        %v1708 = vunpack.c.l.b16 %v1648
        %v1709 = vunpack.c.l.b16 %v1649
        %v1710 = vunpack.c.l.b16 %v1650
        %v1711 = vunpack.c.l.b16 %v1651
        %v1712 = vunpack.c.l.b16 %v1652
        %v1713 = vunpack.c.l.b16 %v1653
        %v1714 = vpack.c.b16 %v1699, %v1698
        %v1715 = vpack.c.b16 %v1701, %v1700
        %v1716 = vpack.c.b16 %v1703, %v1702
        %v1717 = vpack.c.b16 %v1705, %v1704
        %v1718 = vpack.c.b16 %v1707, %v1706
        %v1719 = vpack.c.b16 %v1709, %v1708
        %v1720 = vpack.c.b16 %v1711, %v1710
        %v1721 = vpack.c.b16 %v1713, %v1712
        %v1746 = vunpack.c.l.b16 %v1654
        %v1747 = vunpack.c.h.b16 %v1654
        %v1748 = vunpack.c.l.b16 %v1655
        %v1749 = vunpack.c.h.b16 %v1655
        %v1750 = vunpack.c.l.b16 %v1656
        %v1751 = vunpack.c.h.b16 %v1656
        %v1752 = vunpack.c.l.b16 %v1657
        %v1753 = vunpack.c.h.b16 %v1657
        %v1754 = vunpack.c.l.b16 %v1658
        %v1755 = vunpack.c.h.b16 %v1658
        %v1756 = vunpack.c.l.b16 %v1659
        %v1757 = vunpack.c.h.b16 %v1659
        %v1758 = vunpack.c.l.b16 %v1660
        %v1759 = vunpack.c.h.b16 %v1660
        %v1760 = vunpack.c.l.b16 %v1661
        %v1761 = vunpack.c.h.b16 %v1661
        %v1762 = vunpack.c.l.b16 %v1662
        %v1763 = vunpack.c.h.b16 %v1662
        %v1764 = vunpack.c.l.b16 %v1663
        %v1765 = vunpack.c.h.b16 %v1663
        %v1766 = vunpack.c.l.b16 %v1664
        %v1767 = vunpack.c.h.b16 %v1664
        %v1768 = vunpack.c.l.b16 %v1665
        %v1769 = vunpack.c.h.b16 %v1665
        %v1770 = vunpack.c.l.b16 %v1666
        %v1771 = vunpack.c.h.b16 %v1666
        %v1772 = vunpack.c.l.b16 %v1667
        %v1773 = vunpack.c.h.b16 %v1667
        %v1774 = vunpack.c.l.b16 %v1668
        %v1775 = vunpack.c.h.b16 %v1668
        %v1776 = vunpack.c.l.b16 %v1669
        %v1777 = vunpack.c.h.b16 %v1669
        %v1778 = vpack.c.b16 %v1748, %v1746
        %v1779 = vpack.c.b16 %v1749, %v1747
        %v1780 = vpack.c.b16 %v1752, %v1750
        %v1781 = vpack.c.b16 %v1753, %v1751
        %v1782 = vpack.c.b16 %v1756, %v1754
        %v1783 = vpack.c.b16 %v1757, %v1755
        %v1784 = vpack.c.b16 %v1760, %v1758
        %v1785 = vpack.c.b16 %v1761, %v1759
        %v1786 = vpack.c.b16 %v1764, %v1762
        %v1787 = vpack.c.b16 %v1765, %v1763
        %v1788 = vpack.c.b16 %v1768, %v1766
        %v1789 = vpack.c.b16 %v1769, %v1767
        %v1790 = vpack.c.b16 %v1772, %v1770
        %v1791 = vpack.c.b16 %v1773, %v1771
        %v1792 = vpack.c.b16 %v1776, %v1774
        %v1793 = vpack.c.b16 %v1777, %v1775
        %1810 = vmatprep.subr.bf16.mxu0 %v1779
        %1811 = vmatpush1.bf16.msra.mxu0 %v1778
        %1812 = vmatprep.subr.bf16.mxu0 %v1781
        %1813 = vmatpush1.bf16.msra.mxu0 %v1780
        %1814 = vmatprep.subr.bf16.mxu0 %v1783
        %1815 = vmatpush1.bf16.msra.mxu0 %v1782
        %1816 = vmatprep.subr.bf16.mxu0 %v1785
        %1817 = vmatpush1.bf16.msra.mxu0 %v1784
        %1818 = vmatprep.subr.bf16.mxu0 %v1787
        %1819 = vmatpush1.bf16.msra.mxu0 %v1786
        %1820 = vmatprep.subr.bf16.mxu0 %v1789
        %1821 = vmatpush1.bf16.msra.mxu0 %v1788
        %1822 = vmatprep.subr.bf16.mxu0 %v1791
        %1823 = vmatpush1.bf16.msra.mxu0 %v1790
        %1824 = vmatprep.subr.bf16.mxu0 %v1793
        %1825 = vmatpush1.bf16.msra.mxu0 %v1792
        %1826 = vmatprep.subr.bf16.mxu0 0
        %1827 = vmatpush1.bf16.msra.mxu0 0
        %1828 = vmatprep.subr.bf16.mxu0 0
        %1829 = vmatpush1.bf16.msra.mxu0 0
        %1830 = vmatprep.subr.bf16.mxu0 0
        %1831 = vmatpush1.bf16.msra.mxu0 0
        %1832 = vmatprep.subr.bf16.mxu0 0
        %1833 = vmatpush1.bf16.msra.mxu0 0
        %1834 = vmatprep.subr.bf16.mxu0 0
        %1835 = vmatpush1.bf16.msra.mxu0 0
        %1836 = vmatprep.subr.bf16.mxu0 0
        %1837 = vmatpush1.bf16.msra.mxu0 0
        %1838 = vmatprep.subr.bf16.mxu0 0
        %1839 = vmatpush1.bf16.msra.mxu0 0
        %1840 = vmatprep.subr.bf16.mxu0 0
        %1841 = vmatpush1.bf16.msra.mxu0 0
        %1842 = vmatprep.mubr.bf16.mxu0 0
        %1843 = vmatmul.mubr.bf16.gmra.mrb[0].mxu0 %v1714
        %v1844 = vpop.f32.mrb[0].mxu0
        %v1845 = vadd.f32 %v1675, %v1844
        %v1846 = vpop.f32.mrb[0].mxu0
        %v1847 = vadd.f32 %v1679, %v1846
        %v1848 = vpop.f32.mrb[0].mxu0
        %v1849 = vadd.f32 %v1675, %v1848
        %v1850 = vpop.f32.mrb[0].mxu0
        %v1851 = vadd.f32 %v1679, %v1850
        %1852 = vmatprep.mubr.bf16.mxu0 0
        %1853 = vmatmul.mubr.bf16.gmra.mrb[0].mxu0 %v1715
        %v1854 = vpop.f32.mrb[0].mxu0
        %v1855 = vadd.f32 %v1675, %v1854
        %v1856 = vpop.f32.mrb[0].mxu0
        %v1857 = vadd.f32 %v1679, %v1856
        %v1858 = vpop.f32.mrb[0].mxu0
        %v1859 = vadd.f32 %v1675, %v1858
        %v1860 = vpop.f32.mrb[0].mxu0
        %v1861 = vadd.f32 %v1679, %v1860
        %1862 = vmatprep.mubr.bf16.mxu0 0
        %1863 = vmatmul.mubr.bf16.gmra.mrb[0].mxu0 %v1716
        %v1864 = vpop.f32.mrb[0].mxu0
        %v1865 = vadd.f32 %v1675, %v1864
        %v1866 = vpop.f32.mrb[0].mxu0
        %v1867 = vadd.f32 %v1679, %v1866
        %v1868 = vpop.f32.mrb[0].mxu0
        %v1869 = vadd.f32 %v1675, %v1868
        %v1870 = vpop.f32.mrb[0].mxu0
        %v1871 = vadd.f32 %v1679, %v1870
        %1872 = vmatprep.mubr.bf16.mxu0 0
        %1873 = vmatmul.mubr.bf16.gmra.mrb[0].mxu0 %v1717
        %v1874 = vpop.f32.mrb[0].mxu0
        %v1875 = vadd.f32 %v1675, %v1874
        %v1876 = vpop.f32.mrb[0].mxu0
        %v1877 = vadd.f32 %v1679, %v1876
        %v1878 = vpop.f32.mrb[0].mxu0
        %v1879 = vadd.f32 %v1675, %v1878
        %v1880 = vpop.f32.mrb[0].mxu0
        %v1881 = vadd.f32 %v1679, %v1880
        %1882 = vmatprep.mubr.bf16.mxu0 0
        %1883 = vmatmul.mubr.bf16.gmra.mrb[0].mxu0 %v1718
        %v1884 = vpop.f32.mrb[0].mxu0
        %v1885 = vadd.f32 %v1675, %v1884
        %v1886 = vpop.f32.mrb[0].mxu0
        %v1887 = vadd.f32 %v1679, %v1886
        %v1888 = vpop.f32.mrb[0].mxu0
        %v1889 = vadd.f32 %v1675, %v1888
        %v1890 = vpop.f32.mrb[0].mxu0
        %v1891 = vadd.f32 %v1679, %v1890
        %1892 = vmatprep.mubr.bf16.mxu0 0
        %1893 = vmatmul.mubr.bf16.gmra.mrb[0].mxu0 %v1719
        %v1894 = vpop.f32.mrb[0].mxu0
        %v1895 = vadd.f32 %v1675, %v1894
        %v1896 = vpop.f32.mrb[0].mxu0
        %v1897 = vadd.f32 %v1679, %v1896
        %v1898 = vpop.f32.mrb[0].mxu0
        %v1899 = vadd.f32 %v1675, %v1898
        %v1900 = vpop.f32.mrb[0].mxu0
        %v1901 = vadd.f32 %v1679, %v1900
        %1902 = vmatprep.mubr.bf16.mxu0 0
        %1903 = vmatmul.mubr.bf16.gmra.mrb[0].mxu0 %v1720
        %v1904 = vpop.f32.mrb[0].mxu0
        %v1905 = vadd.f32 %v1675, %v1904
        %v1906 = vpop.f32.mrb[0].mxu0
        %v1907 = vadd.f32 %v1679, %v1906
        %v1908 = vpop.f32.mrb[0].mxu0
        %v1909 = vadd.f32 %v1675, %v1908
        %v1910 = vpop.f32.mrb[0].mxu0
        %v1911 = vadd.f32 %v1679, %v1910
        %1912 = vmatprep.mubr.bf16.mxu0 0
        %1913 = vmatmul.mubr.bf16.gmra.mrb[0].mxu0 %v1721
        %v1914 = vpop.f32.mrb[0].mxu0
        %v1915 = vadd.f32 %v1675, %v1914
        %v1916 = vpop.f32.mrb[0].mxu0
        %v1917 = vadd.f32 %v1679, %v1916
        %v1918 = vpop.f32.mrb[0].mxu0
        %v1919 = vadd.f32 %v1675, %v1918
        %v1920 = vpop.f32.mrb[0].mxu0
        %v1921 = vadd.f32 %v1679, %v1920
        %1922 = vdwg.mxu0
        %v1923 = vld [vmem:[#allocation12] sm:$0xff]
        %v1924 = vld [vmem:[#allocation12 + $0x8] sm:$0xff]
        %v1925 = vld [vmem:[#allocation12 + $0x10] sm:$0xff]
        %v1926 = vld [vmem:[#allocation12 + $0x18] sm:$0xff]
        %v1927 = vld [vmem:[#allocation12 + $0x20] sm:$0xff]
        %v1928 = vld [vmem:[#allocation12 + $0x28] sm:$0xff]
        %v1929 = vld [vmem:[#allocation12 + $0x30] sm:$0xff]
        %v1930 = vld [vmem:[#allocation12 + $0x38] sm:$0xff]
        %v1931 = vld [vmem:[#allocation12 + $0x40] sm:$0xff]
        %v1932 = vld [vmem:[#allocation12 + $0x48] sm:$0xff]
        %v1933 = vld [vmem:[#allocation12 + $0x50] sm:$0xff]
        %v1934 = vld [vmem:[#allocation12 + $0x58] sm:$0xff]
        %v1935 = vld [vmem:[#allocation12 + $0x60] sm:$0xff]
        %v1936 = vld [vmem:[#allocation12 + $0x68] sm:$0xff]
        %v1937 = vld [vmem:[#allocation12 + $0x70] sm:$0xff]
        %v1938 = vld [vmem:[#allocation12 + $0x78] sm:$0xff]
        %v1939 = vld [vmem:[#allocation15] sm:$0x3]
        %v1941 = vlaneseq
        %v1942 = vshrl.u32 %v1941, 7
        %v1943 = vsub.s32 0, %v1942
        %v1944 = vrot.slane %v1939, %v1943
        %v1945 = vlaneseq
        %v1946 = vshrl.u32 %v1945, 7
        %v1947 = vsub.s32 1, %v1946
        %v1948 = vrot.slane %v1939, %v1947
        %v1967 = vunpack.c.l.b16 %v1923
        %v1968 = vunpack.c.h.b16 %v1923
        %v1969 = vunpack.c.l.b16 %v1924
        %v1970 = vunpack.c.h.b16 %v1924
        %v1971 = vunpack.c.l.b16 %v1925
        %v1972 = vunpack.c.h.b16 %v1925
        %v1973 = vunpack.c.l.b16 %v1926
        %v1974 = vunpack.c.h.b16 %v1926
        %v1975 = vunpack.c.l.b16 %v1927
        %v1976 = vunpack.c.h.b16 %v1927
        %v1977 = vunpack.c.l.b16 %v1928
        %v1978 = vunpack.c.h.b16 %v1928
        %v1979 = vunpack.c.l.b16 %v1929
        %v1980 = vunpack.c.h.b16 %v1929
        %v1981 = vunpack.c.l.b16 %v1930
        %v1982 = vunpack.c.h.b16 %v1930
        %v1983 = vunpack.c.l.b16 %v1931
        %v1984 = vunpack.c.h.b16 %v1931
        %v1985 = vunpack.c.l.b16 %v1932
        %v1986 = vunpack.c.h.b16 %v1932
        %v1987 = vunpack.c.l.b16 %v1933
        %v1988 = vunpack.c.h.b16 %v1933
        %v1989 = vunpack.c.l.b16 %v1934
        %v1990 = vunpack.c.h.b16 %v1934
        %v1991 = vunpack.c.l.b16 %v1935
        %v1992 = vunpack.c.h.b16 %v1935
        %v1993 = vunpack.c.l.b16 %v1936
        %v1994 = vunpack.c.h.b16 %v1936
        %v1995 = vunpack.c.l.b16 %v1937
        %v1996 = vunpack.c.h.b16 %v1937
        %v1997 = vunpack.c.l.b16 %v1938
        %v1998 = vunpack.c.h.b16 %v1938
        %v1999 = vpack.c.b16 %v1969, %v1967
        %v2000 = vpack.c.b16 %v1970, %v1968
        %v2001 = vpack.c.b16 %v1973, %v1971
        %v2002 = vpack.c.b16 %v1974, %v1972
        %v2003 = vpack.c.b16 %v1977, %v1975
        %v2004 = vpack.c.b16 %v1978, %v1976
        %v2005 = vpack.c.b16 %v1981, %v1979
        %v2006 = vpack.c.b16 %v1982, %v1980
        %v2007 = vpack.c.b16 %v1985, %v1983
        %v2008 = vpack.c.b16 %v1986, %v1984
        %v2009 = vpack.c.b16 %v1989, %v1987
        %v2010 = vpack.c.b16 %v1990, %v1988
        %v2011 = vpack.c.b16 %v1993, %v1991
        %v2012 = vpack.c.b16 %v1994, %v1992
        %v2013 = vpack.c.b16 %v1997, %v1995
        %v2014 = vpack.c.b16 %v1998, %v1996
        %2031 = vmatprep.subr.bf16.mxu0 %v2000
        %2032 = vmatpush1.bf16.msra.mxu0 %v1999
        %2033 = vmatprep.subr.bf16.mxu0 %v2002
        %2034 = vmatpush1.bf16.msra.mxu0 %v2001
        %2035 = vmatprep.subr.bf16.mxu0 %v2004
        %2036 = vmatpush1.bf16.msra.mxu0 %v2003
        %2037 = vmatprep.subr.bf16.mxu0 %v2006
        %2038 = vmatpush1.bf16.msra.mxu0 %v2005
        %2039 = vmatprep.subr.bf16.mxu0 %v2008
        %2040 = vmatpush1.bf16.msra.mxu0 %v2007
        %2041 = vmatprep.subr.bf16.mxu0 %v2010
        %2042 = vmatpush1.bf16.msra.mxu0 %v2009
        %2043 = vmatprep.subr.bf16.mxu0 %v2012
        %2044 = vmatpush1.bf16.msra.mxu0 %v2011
        %2045 = vmatprep.subr.bf16.mxu0 %v2014
        %2046 = vmatpush1.bf16.msra.mxu0 %v2013
        %2047 = vmatprep.subr.bf16.mxu0 0
        %2048 = vmatpush1.bf16.msra.mxu0 0
        %2049 = vmatprep.subr.bf16.mxu0 0
        %2050 = vmatpush1.bf16.msra.mxu0 0
        %2051 = vmatprep.subr.bf16.mxu0 0
        %2052 = vmatpush1.bf16.msra.mxu0 0
        %2053 = vmatprep.subr.bf16.mxu0 0
        %2054 = vmatpush1.bf16.msra.mxu0 0
        %2055 = vmatprep.subr.bf16.mxu0 0
        %2056 = vmatpush1.bf16.msra.mxu0 0
        %2057 = vmatprep.subr.bf16.mxu0 0
        %2058 = vmatpush1.bf16.msra.mxu0 0
        %2059 = vmatprep.subr.bf16.mxu0 0
        %2060 = vmatpush1.bf16.msra.mxu0 0
        %2061 = vmatprep.subr.bf16.mxu0 0
        %2062 = vmatpush1.bf16.msra.mxu0 0
        %2063 = vmatprep.mubr.bf16.mxu0 0
        %2064 = vmatmul.mubr.bf16.gmra.mrb[0].mxu0 %v1714
        %v2065 = vpop.f32.mrb[0].mxu0
        %v2066 = vadd.f32 %v1944, %v2065
        %v2067 = vpop.f32.mrb[0].mxu0
        %v2068 = vadd.f32 %v1948, %v2067
        %v2069 = vpop.f32.mrb[0].mxu0
        %v2070 = vadd.f32 %v1944, %v2069
        %v2071 = vpop.f32.mrb[0].mxu0
        %v2072 = vadd.f32 %v1948, %v2071
        %2073 = vmatprep.mubr.bf16.mxu0 0
        %2074 = vmatmul.mubr.bf16.gmra.mrb[0].mxu0 %v1715
        %v2075 = vpop.f32.mrb[0].mxu0
        %v2076 = vadd.f32 %v1944, %v2075
        %v2077 = vpop.f32.mrb[0].mxu0
        %v2078 = vadd.f32 %v1948, %v2077
        %v2079 = vpop.f32.mrb[0].mxu0
        %v2080 = vadd.f32 %v1944, %v2079
        %v2081 = vpop.f32.mrb[0].mxu0
        %v2082 = vadd.f32 %v1948, %v2081
        %2083 = vmatprep.mubr.bf16.mxu0 0
        %2084 = vmatmul.mubr.bf16.gmra.mrb[0].mxu0 %v1716
        %v2085 = vpop.f32.mrb[0].mxu0
        %v2086 = vadd.f32 %v1944, %v2085
        %v2087 = vpop.f32.mrb[0].mxu0
        %v2088 = vadd.f32 %v1948, %v2087
        %v2089 = vpop.f32.mrb[0].mxu0
        %v2090 = vadd.f32 %v1944, %v2089
        %v2091 = vpop.f32.mrb[0].mxu0
        %v2092 = vadd.f32 %v1948, %v2091
        %2093 = vmatprep.mubr.bf16.mxu0 0
        %2094 = vmatmul.mubr.bf16.gmra.mrb[0].mxu0 %v1717
        %v2095 = vpop.f32.mrb[0].mxu0
        %v2096 = vadd.f32 %v1944, %v2095
        %v2097 = vpop.f32.mrb[0].mxu0
        %v2098 = vadd.f32 %v1948, %v2097
        %v2099 = vpop.f32.mrb[0].mxu0
        %v2100 = vadd.f32 %v1944, %v2099
        %v2101 = vpop.f32.mrb[0].mxu0
        %v2102 = vadd.f32 %v1948, %v2101
        %2103 = vmatprep.mubr.bf16.mxu0 0
        %2104 = vmatmul.mubr.bf16.gmra.mrb[0].mxu0 %v1718
        %v2105 = vpop.f32.mrb[0].mxu0
        %v2106 = vadd.f32 %v1944, %v2105
        %v2107 = vpop.f32.mrb[0].mxu0
        %v2108 = vadd.f32 %v1948, %v2107
        %v2109 = vpop.f32.mrb[0].mxu0
        %v2110 = vadd.f32 %v1944, %v2109
        %v2111 = vpop.f32.mrb[0].mxu0
        %v2112 = vadd.f32 %v1948, %v2111
        %2113 = vmatprep.mubr.bf16.mxu0 0
        %2114 = vmatmul.mubr.bf16.gmra.mrb[0].mxu0 %v1719
        %v2115 = vpop.f32.mrb[0].mxu0
        %v2116 = vadd.f32 %v1944, %v2115
        %v2117 = vpop.f32.mrb[0].mxu0
        %v2118 = vadd.f32 %v1948, %v2117
        %v2119 = vpop.f32.mrb[0].mxu0
        %v2120 = vadd.f32 %v1944, %v2119
        %v2121 = vpop.f32.mrb[0].mxu0
        %v2122 = vadd.f32 %v1948, %v2121
        %2123 = vmatprep.mubr.bf16.mxu0 0
        %2124 = vmatmul.mubr.bf16.gmra.mrb[0].mxu0 %v1720
        %v2125 = vpop.f32.mrb[0].mxu0
        %v2126 = vadd.f32 %v1944, %v2125
        %v2127 = vpop.f32.mrb[0].mxu0
        %v2128 = vadd.f32 %v1948, %v2127
        %v2129 = vpop.f32.mrb[0].mxu0
        %v2130 = vadd.f32 %v1944, %v2129
        %v2131 = vpop.f32.mrb[0].mxu0
        %v2132 = vadd.f32 %v1948, %v2131
        %2133 = vmatprep.mubr.bf16.mxu0 0
        %2134 = vmatmul.mubr.bf16.gmra.mrb[0].mxu0 %v1721
        %v2135 = vpop.f32.mrb[0].mxu0
        %v2136 = vadd.f32 %v1944, %v2135
        %v2137 = vpop.f32.mrb[0].mxu0
        %v2138 = vadd.f32 %v1948, %v2137
        %v2139 = vpop.f32.mrb[0].mxu0
        %v2140 = vadd.f32 %v1944, %v2139
        %v2141 = vpop.f32.mrb[0].mxu0
        %v2142 = vadd.f32 %v1948, %v2141
        %2143 = vdwg.mxu0
        %v2144 = vadd.f32 %v1845, %v1410
        %v2145 = vadd.f32 %v1847, %v1412
        %v2146 = vadd.f32 %v1849, %v1414
        %v2147 = vadd.f32 %v1851, %v1416
        %v2148 = vadd.f32 %v1855, %v1420
        %v2149 = vadd.f32 %v1857, %v1422
        %v2150 = vadd.f32 %v1859, %v1424
        %v2151 = vadd.f32 %v1861, %v1426
        %v2152 = vadd.f32 %v1865, %v1430
        %v2153 = vadd.f32 %v1867, %v1432
        %v2154 = vadd.f32 %v1869, %v1434
        %v2155 = vadd.f32 %v1871, %v1436
        %v2156 = vadd.f32 %v1875, %v1440
        %v2157 = vadd.f32 %v1877, %v1442
        %v2158 = vadd.f32 %v1879, %v1444
        %v2159 = vadd.f32 %v1881, %v1446
        %v2160 = vadd.f32 %v1885, %v1450
        %v2161 = vadd.f32 %v1887, %v1452
        %v2162 = vadd.f32 %v1889, %v1454
        %v2163 = vadd.f32 %v1891, %v1456
        %v2164 = vadd.f32 %v1895, %v1460
        %v2165 = vadd.f32 %v1897, %v1462
        %v2166 = vadd.f32 %v1899, %v1464
        %v2167 = vadd.f32 %v1901, %v1466
        %v2168 = vadd.f32 %v1905, %v1470
        %v2169 = vadd.f32 %v1907, %v1472
        %v2170 = vadd.f32 %v1909, %v1474
        %v2171 = vadd.f32 %v1911, %v1476
        %v2172 = vadd.f32 %v1915, %v1480
        %v2173 = vadd.f32 %v1917, %v1482
        %v2174 = vadd.f32 %v1919, %v1484
        %v2175 = vadd.f32 %v1921, %v1486
        %v2176 = vmax.f32 %v2144, 0.0
        %v2177 = vmax.f32 %v2145, 0.0
        %v2178 = vmax.f32 %v2146, 0.0
        %v2179 = vmax.f32 %v2147, 0.0
        %v2180 = vmax.f32 %v2148, 0.0
        %v2181 = vmax.f32 %v2149, 0.0
        %v2182 = vmax.f32 %v2150, 0.0
        %v2183 = vmax.f32 %v2151, 0.0
        %v2184 = vmax.f32 %v2152, 0.0
        %v2185 = vmax.f32 %v2153, 0.0
        %v2186 = vmax.f32 %v2154, 0.0
        %v2187 = vmax.f32 %v2155, 0.0
        %v2188 = vmax.f32 %v2156, 0.0
        %v2189 = vmax.f32 %v2157, 0.0
        %v2190 = vmax.f32 %v2158, 0.0
        %v2191 = vmax.f32 %v2159, 0.0
        %v2192 = vmax.f32 %v2160, 0.0
        %v2193 = vmax.f32 %v2161, 0.0
        %v2194 = vmax.f32 %v2162, 0.0
        %v2195 = vmax.f32 %v2163, 0.0
        %v2196 = vmax.f32 %v2164, 0.0
        %v2197 = vmax.f32 %v2165, 0.0
        %v2198 = vmax.f32 %v2166, 0.0
        %v2199 = vmax.f32 %v2167, 0.0
        %v2200 = vmax.f32 %v2168, 0.0
        %v2201 = vmax.f32 %v2169, 0.0
        %v2202 = vmax.f32 %v2170, 0.0
        %v2203 = vmax.f32 %v2171, 0.0
        %v2204 = vmax.f32 %v2172, 0.0
        %v2205 = vmax.f32 %v2173, 0.0
        %v2206 = vmax.f32 %v2174, 0.0
        %v2207 = vmax.f32 %v2175, 0.0
        %v2208 = vpack.c.bf16 %v2178, %v2176
        %v2209 = vpack.c.bf16 %v2179, %v2177
        %v2210 = vpack.c.bf16 %v2182, %v2180
        %v2211 = vpack.c.bf16 %v2183, %v2181
        %v2212 = vpack.c.bf16 %v2186, %v2184
        %v2213 = vpack.c.bf16 %v2187, %v2185
        %v2214 = vpack.c.bf16 %v2190, %v2188
        %v2215 = vpack.c.bf16 %v2191, %v2189
        %v2216 = vpack.c.bf16 %v2194, %v2192
        %v2217 = vpack.c.bf16 %v2195, %v2193
        %v2218 = vpack.c.bf16 %v2198, %v2196
        %v2219 = vpack.c.bf16 %v2199, %v2197
        %v2220 = vpack.c.bf16 %v2202, %v2200
        %v2221 = vpack.c.bf16 %v2203, %v2201
        %v2222 = vpack.c.bf16 %v2206, %v2204
        %v2223 = vpack.c.bf16 %v2207, %v2205
        %v2224 = vadd.f32 %v2066, %v1555
        %v2225 = vadd.f32 %v2068, %v1557
        %v2226 = vadd.f32 %v2070, %v1559
        %v2227 = vadd.f32 %v2072, %v1561
        %v2228 = vadd.f32 %v2076, %v1565
        %v2229 = vadd.f32 %v2078, %v1567
        %v2230 = vadd.f32 %v2080, %v1569
        %v2231 = vadd.f32 %v2082, %v1571
        %v2232 = vadd.f32 %v2086, %v1575
        %v2233 = vadd.f32 %v2088, %v1577
        %v2234 = vadd.f32 %v2090, %v1579
        %v2235 = vadd.f32 %v2092, %v1581
        %v2236 = vadd.f32 %v2096, %v1585
        %v2237 = vadd.f32 %v2098, %v1587
        %v2238 = vadd.f32 %v2100, %v1589
        %v2239 = vadd.f32 %v2102, %v1591
        %v2240 = vadd.f32 %v2106, %v1595
        %v2241 = vadd.f32 %v2108, %v1597
        %v2242 = vadd.f32 %v2110, %v1599
        %v2243 = vadd.f32 %v2112, %v1601
        %v2244 = vadd.f32 %v2116, %v1605
        %v2245 = vadd.f32 %v2118, %v1607
        %v2246 = vadd.f32 %v2120, %v1609
        %v2247 = vadd.f32 %v2122, %v1611
        %v2248 = vadd.f32 %v2126, %v1615
        %v2249 = vadd.f32 %v2128, %v1617
        %v2250 = vadd.f32 %v2130, %v1619
        %v2251 = vadd.f32 %v2132, %v1621
        %v2252 = vadd.f32 %v2136, %v1625
        %v2253 = vadd.f32 %v2138, %v1627
        %v2254 = vadd.f32 %v2140, %v1629
        %v2255 = vadd.f32 %v2142, %v1631
        %v2256 = vmax.f32 %v2224, 0.0
        %v2257 = vmax.f32 %v2225, 0.0
        %v2258 = vmax.f32 %v2226, 0.0
        %v2259 = vmax.f32 %v2227, 0.0
        %v2260 = vmax.f32 %v2228, 0.0
        %v2261 = vmax.f32 %v2229, 0.0
        %v2262 = vmax.f32 %v2230, 0.0
        %v2263 = vmax.f32 %v2231, 0.0
        %v2264 = vmax.f32 %v2232, 0.0
        %v2265 = vmax.f32 %v2233, 0.0
        %v2266 = vmax.f32 %v2234, 0.0
        %v2267 = vmax.f32 %v2235, 0.0
        %v2268 = vmax.f32 %v2236, 0.0
        %v2269 = vmax.f32 %v2237, 0.0
        %v2270 = vmax.f32 %v2238, 0.0
        %v2271 = vmax.f32 %v2239, 0.0
        %v2272 = vmax.f32 %v2240, 0.0
        %v2273 = vmax.f32 %v2241, 0.0
        %v2274 = vmax.f32 %v2242, 0.0
        %v2275 = vmax.f32 %v2243, 0.0
        %v2276 = vmax.f32 %v2244, 0.0
        %v2277 = vmax.f32 %v2245, 0.0
        %v2278 = vmax.f32 %v2246, 0.0
        %v2279 = vmax.f32 %v2247, 0.0
        %v2280 = vmax.f32 %v2248, 0.0
        %v2281 = vmax.f32 %v2249, 0.0
        %v2282 = vmax.f32 %v2250, 0.0
        %v2283 = vmax.f32 %v2251, 0.0
        %v2284 = vmax.f32 %v2252, 0.0
        %v2285 = vmax.f32 %v2253, 0.0
        %v2286 = vmax.f32 %v2254, 0.0
        %v2287 = vmax.f32 %v2255, 0.0
        %v2288 = vpack.c.bf16 %v2258, %v2256
        %v2289 = vpack.c.bf16 %v2259, %v2257
        %v2290 = vpack.c.bf16 %v2262, %v2260
        %v2291 = vpack.c.bf16 %v2263, %v2261
        %v2292 = vpack.c.bf16 %v2266, %v2264
        %v2293 = vpack.c.bf16 %v2267, %v2265
        %v2294 = vpack.c.bf16 %v2270, %v2268
        %v2295 = vpack.c.bf16 %v2271, %v2269
        %v2296 = vpack.c.bf16 %v2274, %v2272
        %v2297 = vpack.c.bf16 %v2275, %v2273
        %v2298 = vpack.c.bf16 %v2278, %v2276
        %v2299 = vpack.c.bf16 %v2279, %v2277
        %v2300 = vpack.c.bf16 %v2282, %v2280
        %v2301 = vpack.c.bf16 %v2283, %v2281
        %v2302 = vpack.c.bf16 %v2286, %v2284
        %v2303 = vpack.c.bf16 %v2287, %v2285
        %v2304 = vld [vmem:[#allocation22] sm:$0xf]
        %v2305 = vld [vmem:[#allocation22 + $0x4] sm:$0xf]
        %v2306 = vld [vmem:[#allocation22 + $0x8] sm:$0xf]
        %v2307 = vld [vmem:[#allocation22 + $0xc] sm:$0xf]
        %v2308 = vld [vmem:[#allocation22 + $0x10] sm:$0xf]
        %v2309 = vld [vmem:[#allocation22 + $0x14] sm:$0xf]
        %v2310 = vld [vmem:[#allocation22 + $0x18] sm:$0xf]
        %v2311 = vld [vmem:[#allocation22 + $0x1c] sm:$0xf]
        %v2312 = vld [vmem:[#allocation22 + $0x20] sm:$0xf]
        %v2313 = vld [vmem:[#allocation22 + $0x24] sm:$0xf]
        %v2314 = vld [vmem:[#allocation22 + $0x28] sm:$0xf]
        %v2315 = vld [vmem:[#allocation22 + $0x2c] sm:$0xf]
        %v2316 = vld [vmem:[#allocation22 + $0x30] sm:$0xf]
        %v2317 = vld [vmem:[#allocation22 + $0x34] sm:$0xf]
        %v2318 = vld [vmem:[#allocation22 + $0x38] sm:$0xf]
        %v2319 = vld [vmem:[#allocation22 + $0x3c] sm:$0xf]
        %v2320 = vld [vmem:[#allocation22 + $0x40] sm:$0xf]
        %v2321 = vld [vmem:[#allocation22 + $0x44] sm:$0xf]
        %v2322 = vld [vmem:[#allocation22 + $0x48] sm:$0xf]
        %v2323 = vld [vmem:[#allocation22 + $0x4c] sm:$0xf]
        %v2324 = vld [vmem:[#allocation22 + $0x50] sm:$0xf]
        %v2325 = vld [vmem:[#allocation22 + $0x54] sm:$0xf]
        %v2326 = vld [vmem:[#allocation22 + $0x58] sm:$0xf]
        %v2327 = vld [vmem:[#allocation22 + $0x5c] sm:$0xf]
        %v2328 = vld [vmem:[#allocation22 + $0x60] sm:$0xf]
        %v2329 = vld [vmem:[#allocation22 + $0x64] sm:$0xf]
        %v2330 = vld [vmem:[#allocation22 + $0x68] sm:$0xf]
        %v2331 = vld [vmem:[#allocation22 + $0x6c] sm:$0xf]
        %v2332 = vld [vmem:[#allocation22 + $0x70] sm:$0xf]
        %v2333 = vld [vmem:[#allocation22 + $0x74] sm:$0xf]
        %v2334 = vld [vmem:[#allocation22 + $0x78] sm:$0xf]
        %v2335 = vld [vmem:[#allocation22 + $0x7c] sm:$0xf]
        %v2336 = vld [vmem:[#allocation24] sm:$0xf]
        %v2337 = vld [vmem:[#allocation24 + $0x4] sm:$0xf]
        %v2338 = vld [vmem:[#allocation24 + $0x8] sm:$0xf]
        %v2339 = vld [vmem:[#allocation24 + $0xc] sm:$0xf]
        %v2340 = vld [vmem:[#allocation24 + $0x10] sm:$0xf]
        %v2341 = vld [vmem:[#allocation24 + $0x14] sm:$0xf]
        %v2342 = vld [vmem:[#allocation24 + $0x18] sm:$0xf]
        %v2343 = vld [vmem:[#allocation24 + $0x1c] sm:$0xf]
        %v2344 = vld [vmem:[#allocation24 + $0x20] sm:$0xf]
        %v2345 = vld [vmem:[#allocation24 + $0x24] sm:$0xf]
        %v2346 = vld [vmem:[#allocation24 + $0x28] sm:$0xf]
        %v2347 = vld [vmem:[#allocation24 + $0x2c] sm:$0xf]
        %v2348 = vld [vmem:[#allocation24 + $0x30] sm:$0xf]
        %v2349 = vld [vmem:[#allocation24 + $0x34] sm:$0xf]
        %v2350 = vld [vmem:[#allocation24 + $0x38] sm:$0xf]
        %v2351 = vld [vmem:[#allocation24 + $0x3c] sm:$0xf]
        %v2352 = vld [vmem:[#allocation24 + $0x40] sm:$0xf]
        %v2353 = vld [vmem:[#allocation24 + $0x44] sm:$0xf]
        %v2354 = vld [vmem:[#allocation24 + $0x48] sm:$0xf]
        %v2355 = vld [vmem:[#allocation24 + $0x4c] sm:$0xf]
        %v2356 = vld [vmem:[#allocation24 + $0x50] sm:$0xf]
        %v2357 = vld [vmem:[#allocation24 + $0x54] sm:$0xf]
        %v2358 = vld [vmem:[#allocation24 + $0x58] sm:$0xf]
        %v2359 = vld [vmem:[#allocation24 + $0x5c] sm:$0xf]
        %v2360 = vld [vmem:[#allocation24 + $0x60] sm:$0xf]
        %v2361 = vld [vmem:[#allocation24 + $0x64] sm:$0xf]
        %v2362 = vld [vmem:[#allocation24 + $0x68] sm:$0xf]
        %v2363 = vld [vmem:[#allocation24 + $0x6c] sm:$0xf]
        %v2364 = vld [vmem:[#allocation24 + $0x70] sm:$0xf]
        %v2365 = vld [vmem:[#allocation24 + $0x74] sm:$0xf]
        %v2366 = vld [vmem:[#allocation24 + $0x78] sm:$0xf]
        %v2367 = vld [vmem:[#allocation24 + $0x7c] sm:$0xf]
        %v2400 = vunpack.c.l.b16 %v2336
        %v2401 = vunpack.c.l.b16 %v2337
        %v2402 = vunpack.c.l.b16 %v2338
        %v2403 = vunpack.c.l.b16 %v2339
        %v2404 = vunpack.c.l.b16 %v2340
        %v2405 = vunpack.c.l.b16 %v2341
        %v2406 = vunpack.c.l.b16 %v2342
        %v2407 = vunpack.c.l.b16 %v2343
        %v2408 = vunpack.c.l.b16 %v2344
        %v2409 = vunpack.c.l.b16 %v2345
        %v2410 = vunpack.c.l.b16 %v2346
        %v2411 = vunpack.c.l.b16 %v2347
        %v2412 = vunpack.c.l.b16 %v2348
        %v2413 = vunpack.c.l.b16 %v2349
        %v2414 = vunpack.c.l.b16 %v2350
        %v2415 = vunpack.c.l.b16 %v2351
        %v2416 = vunpack.c.l.b16 %v2352
        %v2417 = vunpack.c.l.b16 %v2353
        %v2418 = vunpack.c.l.b16 %v2354
        %v2419 = vunpack.c.l.b16 %v2355
        %v2420 = vunpack.c.l.b16 %v2356
        %v2421 = vunpack.c.l.b16 %v2357
        %v2422 = vunpack.c.l.b16 %v2358
        %v2423 = vunpack.c.l.b16 %v2359
        %v2424 = vunpack.c.l.b16 %v2360
        %v2425 = vunpack.c.l.b16 %v2361
        %v2426 = vunpack.c.l.b16 %v2362
        %v2427 = vunpack.c.l.b16 %v2363
        %v2428 = vunpack.c.l.b16 %v2364
        %v2429 = vunpack.c.l.b16 %v2365
        %v2430 = vunpack.c.l.b16 %v2366
        %v2431 = vunpack.c.l.b16 %v2367
        %v2432 = vpack.c.b16 %v2401, %v2400
        %v2433 = vpack.c.b16 %v2403, %v2402
        %v2434 = vpack.c.b16 %v2405, %v2404
        %v2435 = vpack.c.b16 %v2407, %v2406
        %v2436 = vpack.c.b16 %v2409, %v2408
        %v2437 = vpack.c.b16 %v2411, %v2410
        %v2438 = vpack.c.b16 %v2413, %v2412
        %v2439 = vpack.c.b16 %v2415, %v2414
        %v2440 = vpack.c.b16 %v2417, %v2416
        %v2441 = vpack.c.b16 %v2419, %v2418
        %v2442 = vpack.c.b16 %v2421, %v2420
        %v2443 = vpack.c.b16 %v2423, %v2422
        %v2444 = vpack.c.b16 %v2425, %v2424
        %v2445 = vpack.c.b16 %v2427, %v2426
        %v2446 = vpack.c.b16 %v2429, %v2428
        %v2447 = vpack.c.b16 %v2431, %v2430
        %2464 = vmatprep.subr.bf16.mxu0 0
        %2465 = vmatpush1.bf16.msra.mxu0 %v2432
        %2466 = vmatprep.subr.bf16.mxu0 0
        %2467 = vmatpush1.bf16.msra.mxu0 %v2433
        %2468 = vmatprep.subr.bf16.mxu0 0
        %2469 = vmatpush1.bf16.msra.mxu0 %v2434
        %2470 = vmatprep.subr.bf16.mxu0 0
        %2471 = vmatpush1.bf16.msra.mxu0 %v2435
        %2472 = vmatprep.subr.bf16.mxu0 0
        %2473 = vmatpush1.bf16.msra.mxu0 %v2436
        %2474 = vmatprep.subr.bf16.mxu0 0
        %2475 = vmatpush1.bf16.msra.mxu0 %v2437
        %2476 = vmatprep.subr.bf16.mxu0 0
        %2477 = vmatpush1.bf16.msra.mxu0 %v2438
        %2478 = vmatprep.subr.bf16.mxu0 0
        %2479 = vmatpush1.bf16.msra.mxu0 %v2439
        %2480 = vmatprep.subr.bf16.mxu0 0
        %2481 = vmatpush1.bf16.msra.mxu0 %v2440
        %2482 = vmatprep.subr.bf16.mxu0 0
        %2483 = vmatpush1.bf16.msra.mxu0 %v2441
        %2484 = vmatprep.subr.bf16.mxu0 0
        %2485 = vmatpush1.bf16.msra.mxu0 %v2442
        %2486 = vmatprep.subr.bf16.mxu0 0
        %2487 = vmatpush1.bf16.msra.mxu0 %v2443
        %2488 = vmatprep.subr.bf16.mxu0 0
        %2489 = vmatpush1.bf16.msra.mxu0 %v2444
        %2490 = vmatprep.subr.bf16.mxu0 0
        %2491 = vmatpush1.bf16.msra.mxu0 %v2445
        %2492 = vmatprep.subr.bf16.mxu0 0
        %2493 = vmatpush1.bf16.msra.mxu0 %v2446
        %2494 = vmatprep.subr.bf16.mxu0 0
        %2495 = vmatpush1.bf16.msra.mxu0 %v2447
        %2496 = vmatprep.mubr.bf16.mxu0 %v2289
        %2497 = vmatmul.mubr.bf16.gmra.mrb[0].mxu0 %v2288
        %v2498 = vpop.f32.mrb[0].mxu0
        %v2499 = vadd.f32 0.0, %v2498
        %v2500 = vpop.f32.mrb[0].mxu0
        %v2501 = vpop.f32.mrb[0].mxu0
        %v2502 = vadd.f32 0.0, %v2501
        %v2503 = vpop.f32.mrb[0].mxu0
        %2504 = vmatprep.mubr.bf16.mxu0 %v2291
        %2505 = vmatmul.mubr.bf16.gmra.mrb[0].mxu0 %v2290
        %v2506 = vpop.f32.mrb[0].mxu0
        %v2507 = vadd.f32 0.0, %v2506
        %v2508 = vpop.f32.mrb[0].mxu0
        %v2509 = vpop.f32.mrb[0].mxu0
        %v2510 = vadd.f32 0.0, %v2509
        %v2511 = vpop.f32.mrb[0].mxu0
        %2512 = vmatprep.mubr.bf16.mxu0 %v2293
        %2513 = vmatmul.mubr.bf16.gmra.mrb[0].mxu0 %v2292
        %v2514 = vpop.f32.mrb[0].mxu0
        %v2515 = vadd.f32 0.0, %v2514
        %v2516 = vpop.f32.mrb[0].mxu0
        %v2517 = vpop.f32.mrb[0].mxu0
        %v2518 = vadd.f32 0.0, %v2517
        %v2519 = vpop.f32.mrb[0].mxu0
        %2520 = vmatprep.mubr.bf16.mxu0 %v2295
        %2521 = vmatmul.mubr.bf16.gmra.mrb[0].mxu0 %v2294
        %v2522 = vpop.f32.mrb[0].mxu0
        %v2523 = vadd.f32 0.0, %v2522
        %v2524 = vpop.f32.mrb[0].mxu0
        %v2525 = vpop.f32.mrb[0].mxu0
        %v2526 = vadd.f32 0.0, %v2525
        %v2527 = vpop.f32.mrb[0].mxu0
        %2528 = vmatprep.mubr.bf16.mxu0 %v2297
        %2529 = vmatmul.mubr.bf16.gmra.mrb[0].mxu0 %v2296
        %v2530 = vpop.f32.mrb[0].mxu0
        %v2531 = vadd.f32 0.0, %v2530
        %v2532 = vpop.f32.mrb[0].mxu0
        %v2533 = vpop.f32.mrb[0].mxu0
        %v2534 = vadd.f32 0.0, %v2533
        %v2535 = vpop.f32.mrb[0].mxu0
        %2536 = vmatprep.mubr.bf16.mxu0 %v2299
        %2537 = vmatmul.mubr.bf16.gmra.mrb[0].mxu0 %v2298
        %v2538 = vpop.f32.mrb[0].mxu0
        %v2539 = vadd.f32 0.0, %v2538
        %v2540 = vpop.f32.mrb[0].mxu0
        %v2541 = vpop.f32.mrb[0].mxu0
        %v2542 = vadd.f32 0.0, %v2541
        %v2543 = vpop.f32.mrb[0].mxu0
        %2544 = vmatprep.mubr.bf16.mxu0 %v2301
        %2545 = vmatmul.mubr.bf16.gmra.mrb[0].mxu0 %v2300
        %v2546 = vpop.f32.mrb[0].mxu0
        %v2547 = vadd.f32 0.0, %v2546
        %v2548 = vpop.f32.mrb[0].mxu0
        %v2549 = vpop.f32.mrb[0].mxu0
        %v2550 = vadd.f32 0.0, %v2549
        %v2551 = vpop.f32.mrb[0].mxu0
        %2552 = vmatprep.mubr.bf16.mxu0 %v2303
        %2553 = vmatmul.mubr.bf16.gmra.mrb[0].mxu0 %v2302
        %v2554 = vpop.f32.mrb[0].mxu0
        %v2555 = vadd.f32 0.0, %v2554
        %v2556 = vpop.f32.mrb[0].mxu0
        %v2557 = vpop.f32.mrb[0].mxu0
        %v2558 = vadd.f32 0.0, %v2557
        %v2559 = vpop.f32.mrb[0].mxu0
        %2560 = vdwg.mxu0
        %v2593 = vunpack.c.l.b16 %v2304
        %v2594 = vunpack.c.l.b16 %v2305
        %v2595 = vunpack.c.l.b16 %v2306
        %v2596 = vunpack.c.l.b16 %v2307
        %v2597 = vunpack.c.l.b16 %v2308
        %v2598 = vunpack.c.l.b16 %v2309
        %v2599 = vunpack.c.l.b16 %v2310
        %v2600 = vunpack.c.l.b16 %v2311
        %v2601 = vunpack.c.l.b16 %v2312
        %v2602 = vunpack.c.l.b16 %v2313
        %v2603 = vunpack.c.l.b16 %v2314
        %v2604 = vunpack.c.l.b16 %v2315
        %v2605 = vunpack.c.l.b16 %v2316
        %v2606 = vunpack.c.l.b16 %v2317
        %v2607 = vunpack.c.l.b16 %v2318
        %v2608 = vunpack.c.l.b16 %v2319
        %v2609 = vunpack.c.l.b16 %v2320
        %v2610 = vunpack.c.l.b16 %v2321
        %v2611 = vunpack.c.l.b16 %v2322
        %v2612 = vunpack.c.l.b16 %v2323
        %v2613 = vunpack.c.l.b16 %v2324
        %v2614 = vunpack.c.l.b16 %v2325
        %v2615 = vunpack.c.l.b16 %v2326
        %v2616 = vunpack.c.l.b16 %v2327
        %v2617 = vunpack.c.l.b16 %v2328
        %v2618 = vunpack.c.l.b16 %v2329
        %v2619 = vunpack.c.l.b16 %v2330
        %v2620 = vunpack.c.l.b16 %v2331
        %v2621 = vunpack.c.l.b16 %v2332
        %v2622 = vunpack.c.l.b16 %v2333
        %v2623 = vunpack.c.l.b16 %v2334
        %v2624 = vunpack.c.l.b16 %v2335
        %v2625 = vpack.c.b16 %v2594, %v2593
        %v2626 = vpack.c.b16 %v2596, %v2595
        %v2627 = vpack.c.b16 %v2598, %v2597
        %v2628 = vpack.c.b16 %v2600, %v2599
        %v2629 = vpack.c.b16 %v2602, %v2601
        %v2630 = vpack.c.b16 %v2604, %v2603
        %v2631 = vpack.c.b16 %v2606, %v2605
        %v2632 = vpack.c.b16 %v2608, %v2607
        %v2633 = vpack.c.b16 %v2610, %v2609
        %v2634 = vpack.c.b16 %v2612, %v2611
        %v2635 = vpack.c.b16 %v2614, %v2613
        %v2636 = vpack.c.b16 %v2616, %v2615
        %v2637 = vpack.c.b16 %v2618, %v2617
        %v2638 = vpack.c.b16 %v2620, %v2619
        %v2639 = vpack.c.b16 %v2622, %v2621
        %v2640 = vpack.c.b16 %v2624, %v2623
        %2657 = vmatprep.subr.bf16.mxu0 0
        %2658 = vmatpush1.bf16.msra.mxu0 %v2625
        %2659 = vmatprep.subr.bf16.mxu0 0
        %2660 = vmatpush1.bf16.msra.mxu0 %v2626
        %2661 = vmatprep.subr.bf16.mxu0 0
        %2662 = vmatpush1.bf16.msra.mxu0 %v2627
        %2663 = vmatprep.subr.bf16.mxu0 0
        %2664 = vmatpush1.bf16.msra.mxu0 %v2628
        %2665 = vmatprep.subr.bf16.mxu0 0
        %2666 = vmatpush1.bf16.msra.mxu0 %v2629
        %2667 = vmatprep.subr.bf16.mxu0 0
        %2668 = vmatpush1.bf16.msra.mxu0 %v2630
        %2669 = vmatprep.subr.bf16.mxu0 0
        %2670 = vmatpush1.bf16.msra.mxu0 %v2631
        %2671 = vmatprep.subr.bf16.mxu0 0
        %2672 = vmatpush1.bf16.msra.mxu0 %v2632
        %2673 = vmatprep.subr.bf16.mxu0 0
        %2674 = vmatpush1.bf16.msra.mxu0 %v2633
        %2675 = vmatprep.subr.bf16.mxu0 0
        %2676 = vmatpush1.bf16.msra.mxu0 %v2634
        %2677 = vmatprep.subr.bf16.mxu0 0
        %2678 = vmatpush1.bf16.msra.mxu0 %v2635
        %2679 = vmatprep.subr.bf16.mxu0 0
        %2680 = vmatpush1.bf16.msra.mxu0 %v2636
        %2681 = vmatprep.subr.bf16.mxu0 0
        %2682 = vmatpush1.bf16.msra.mxu0 %v2637
        %2683 = vmatprep.subr.bf16.mxu0 0
        %2684 = vmatpush1.bf16.msra.mxu0 %v2638
        %2685 = vmatprep.subr.bf16.mxu0 0
        %2686 = vmatpush1.bf16.msra.mxu0 %v2639
        %2687 = vmatprep.subr.bf16.mxu0 0
        %2688 = vmatpush1.bf16.msra.mxu0 %v2640
        %2689 = vmatprep.mubr.bf16.mxu0 %v2209
        %2690 = vmatmul.mubr.bf16.gmra.mrb[0].mxu0 %v2208
        %v2691 = vpop.f32.mrb[0].mxu0
        %v2692 = vadd.f32 %v2499, %v2691
        %v2693 = vpop.f32.mrb[0].mxu0
        %v2694 = vpop.f32.mrb[0].mxu0
        %v2695 = vadd.f32 %v2502, %v2694
        %v2696 = vpop.f32.mrb[0].mxu0
        %2697 = vmatprep.mubr.bf16.mxu0 %v2211
        %2698 = vmatmul.mubr.bf16.gmra.mrb[0].mxu0 %v2210
        %v2699 = vpop.f32.mrb[0].mxu0
        %v2700 = vadd.f32 %v2507, %v2699
        %v2701 = vpop.f32.mrb[0].mxu0
        %v2702 = vpop.f32.mrb[0].mxu0
        %v2703 = vadd.f32 %v2510, %v2702
        %v2704 = vpop.f32.mrb[0].mxu0
        %2705 = vmatprep.mubr.bf16.mxu0 %v2213
        %2706 = vmatmul.mubr.bf16.gmra.mrb[0].mxu0 %v2212
        %v2707 = vpop.f32.mrb[0].mxu0
        %v2708 = vadd.f32 %v2515, %v2707
        %v2709 = vpop.f32.mrb[0].mxu0
        %v2710 = vpop.f32.mrb[0].mxu0
        %v2711 = vadd.f32 %v2518, %v2710
        %v2712 = vpop.f32.mrb[0].mxu0
        %2713 = vmatprep.mubr.bf16.mxu0 %v2215
        %2714 = vmatmul.mubr.bf16.gmra.mrb[0].mxu0 %v2214
        %v2715 = vpop.f32.mrb[0].mxu0
        %v2716 = vadd.f32 %v2523, %v2715
        %v2717 = vpop.f32.mrb[0].mxu0
        %v2718 = vpop.f32.mrb[0].mxu0
        %v2719 = vadd.f32 %v2526, %v2718
        %v2720 = vpop.f32.mrb[0].mxu0
        %2721 = vmatprep.mubr.bf16.mxu0 %v2217
        %2722 = vmatmul.mubr.bf16.gmra.mrb[0].mxu0 %v2216
        %v2723 = vpop.f32.mrb[0].mxu0
        %v2724 = vadd.f32 %v2531, %v2723
        %v2725 = vpop.f32.mrb[0].mxu0
        %v2726 = vpop.f32.mrb[0].mxu0
        %v2727 = vadd.f32 %v2534, %v2726
        %v2728 = vpop.f32.mrb[0].mxu0
        %2729 = vmatprep.mubr.bf16.mxu0 %v2219
        %2730 = vmatmul.mubr.bf16.gmra.mrb[0].mxu0 %v2218
        %v2731 = vpop.f32.mrb[0].mxu0
        %v2732 = vadd.f32 %v2539, %v2731
        %v2733 = vpop.f32.mrb[0].mxu0
        %v2734 = vpop.f32.mrb[0].mxu0
        %v2735 = vadd.f32 %v2542, %v2734
        %v2736 = vpop.f32.mrb[0].mxu0
        %2737 = vmatprep.mubr.bf16.mxu0 %v2221
        %2738 = vmatmul.mubr.bf16.gmra.mrb[0].mxu0 %v2220
        %v2739 = vpop.f32.mrb[0].mxu0
        %v2740 = vadd.f32 %v2547, %v2739
        %v2741 = vpop.f32.mrb[0].mxu0
        %v2742 = vpop.f32.mrb[0].mxu0
        %v2743 = vadd.f32 %v2550, %v2742
        %v2744 = vpop.f32.mrb[0].mxu0
        %2745 = vmatprep.mubr.bf16.mxu0 %v2223
        %2746 = vmatmul.mubr.bf16.gmra.mrb[0].mxu0 %v2222
        %v2747 = vpop.f32.mrb[0].mxu0
        %v2748 = vadd.f32 %v2555, %v2747
        %v2749 = vpop.f32.mrb[0].mxu0
        %v2750 = vpop.f32.mrb[0].mxu0
        %v2751 = vadd.f32 %v2558, %v2750
        %v2752 = vpop.f32.mrb[0].mxu0
        %2753 = vdwg.mxu0
        %v2754 = vld [vmem:[#allocation25] sm:$0x1]
        %v2756 = vlaneseq
        %v2757 = vshrl.u32 %v2756, 7
        %v2758 = vsub.s32 0, %v2757
        %v2759 = vrot.slane %v2754, %v2758
        %v2761 = vadd.f32 %v2692, %v2759
        %v2762 = vadd.f32 %v2695, %v2759
        %v2763 = vadd.f32 %v2700, %v2759
        %v2764 = vadd.f32 %v2703, %v2759
        %v2765 = vadd.f32 %v2708, %v2759
        %v2766 = vadd.f32 %v2711, %v2759
        %v2767 = vadd.f32 %v2716, %v2759
        %v2768 = vadd.f32 %v2719, %v2759
        %v2769 = vadd.f32 %v2724, %v2759
        %v2770 = vadd.f32 %v2727, %v2759
        %v2771 = vadd.f32 %v2732, %v2759
        %v2772 = vadd.f32 %v2735, %v2759
        %v2773 = vadd.f32 %v2740, %v2759
        %v2774 = vadd.f32 %v2743, %v2759
        %v2775 = vadd.f32 %v2748, %v2759
        %v2776 = vadd.f32 %v2751, %v2759
        %2777 = vst [vmem:[%s733] sm:$0xff] %v2761
        %2778 = vst [vmem:[%s733 + $0x8] sm:$0xff] %v2762
        %2779 = vst [vmem:[%s733 + $0x10] sm:$0xff] %v2763
        %2780 = vst [vmem:[%s733 + $0x18] sm:$0xff] %v2764
        %2781 = vst [vmem:[%s733 + $0x20] sm:$0xff] %v2765
        %2782 = vst [vmem:[%s733 + $0x28] sm:$0xff] %v2766
        %2783 = vst [vmem:[%s733 + $0x30] sm:$0xff] %v2767
        %2784 = vst [vmem:[%s733 + $0x38] sm:$0xff] %v2768
        %2785 = vst [vmem:[%s733 + $0x40] sm:$0xff] %v2769
        %2786 = vst [vmem:[%s733 + $0x48] sm:$0xff] %v2770
        %2787 = vst [vmem:[%s733 + $0x50] sm:$0xff] %v2771
        %2788 = vst [vmem:[%s733 + $0x58] sm:$0xff] %v2772
        %2789 = vst [vmem:[%s733 + $0x60] sm:$0xff] %v2773
        %2790 = vst [vmem:[%s733 + $0x68] sm:$0xff] %v2774
        %2791 = vst [vmem:[%s733 + $0x70] sm:$0xff] %v2775
        %2792 = vst [vmem:[%s733 + $0x78] sm:$0xff] %v2776
        %s2793 = sand.u32 %s375, 1
        %s2794 = scalar_lea.sflag [#allocation6], %s2793
        %s2795 = sand.u32 %s375, 1
        %s2796 = smul.addr %s2795, 128
        %s2797 = scalar_lea.vmem [#allocation27], %s2796
        // Predicated region
        $region137: #{tpu_custom_call.1} parent=75 // pred_check
          %p2798 = pneg %p385
        $region138: #{tpu_custom_call.1} parent=75 // pred_check_branch
          %2800 = sbr.rel (%p2798) target = $region140
        $region139: #{tpu_custom_call.1} parent=75 // pred_region
          %s2801 = smul.u32 16, %s45
          %s2803 = ssub.s32 2048, 2048
          %2804 = vsyncadd %s2794, %s2803
          %s2805 = smul.addr %s44, 16
          %s2806 = sadd.s32 %s2801, %s2805
          %s2807 = smul.addr %s2806, 128
          %s2808 = scalar_lea.hbm %s14, %s2807
          %s2809 = sshll.u32 %s2797, 4
          %s2810 = int_to_ptr.vmem [resolvable:$true] %s2809
          %2815 = dma.vmem_to_hbm [thread:$0]  %s2810, 2048, %s2808, %s2794, 128, 128, 8
        $region140: #{tpu_custom_call.1} parent=75 // pred_fallthru
          _
      $region76: #{tpu_custom_call.1} parent=5 // pred_fallthru
        _
      %p2816 = scmp.le.s32.totalorder 2, %s35
      // Predicated region
      $region141: #{tpu_custom_call.1} parent=5 // pred_check
        %p2817 = pneg %p2816
      $region142: #{tpu_custom_call.1} parent=5 // pred_check_branch
        %2819 = sbr.rel (%p2817) target = $region144
      $region143: #{tpu_custom_call.1} parent=5 // pred_region
        %s2820 = ssub.s32 %s35, 2
        // Predicated region
        $region145: #{tpu_custom_call.1} parent=143 // pred_check
          %p2821 = pneg %p391
        $region146: #{tpu_custom_call.1} parent=143 // pred_check_branch
          %2823 = sbr.rel (%p2821) target = $region148
        $region147: #{tpu_custom_call.1} parent=143 // pred_region
          %s2824 = sand.u32 %s376, 1
          %s2825 = scalar_lea.sflag [#allocation6], %s2824
          %s2826 = sand.u32 %s376, 1
          %s2827 = smul.addr %s2826, 128
          %s2828 = scalar_lea.vmem [#allocation27], %s2827
          %2829 = dma.done %s2825, 2048
        $region148: #{tpu_custom_call.1} parent=143 // pred_fallthru
          _
      $region144: #{tpu_custom_call.1} parent=5 // pred_fallthru
        _
    $region6: #{tpu_custom_call.1} parent=1 // loop_footer
      %s39 = sadd.s32 1, %s35
    $region7: #{tpu_custom_call.1} parent=1 // loop_footer_branch
      %34 = sbr.rel target = $region3
    $region8: #{tpu_custom_call.1} parent=1 // loop_exit
      _
    %2830 = vsyncpa [#allocation5], 1
    %s2831 = scalar_lea.sflag [#allocation5], 1
    %2832 = vsyncpa %s2831, 1
    %2833 = vsyncpa [#allocation8], 1
    %s2834 = scalar_lea.sflag [#allocation8], 1
    %2835 = vsyncpa %s2834, 1
    %2836 = vsyncpa [#allocation11], 1
    %2837 = vsyncpa [#allocation14], 1
    %2838 = vsyncpa [#allocation17], 1
    %2839 = vsyncpa [#allocation20], 1
    %2840 = vsyncpa [#allocation23], 1
    %2841 = vsyncpa [#allocation26], 1
    %2842 = vsyncpa [#allocation6], 1
    %s2843 = scalar_lea.sflag [#allocation6], 1
    %2844 = vsyncpa %s2843, 1

</llo_original>
